<compile_context>
chip_gen: v7x
topology: tpu7x:2x2x1
jax: 0.10.0
libtpu: 0.0.40
codegen_flags: <defaults>
</compile_context>

<pallas_src>
import jax
import jax.numpy as jnp
from jax.experimental import pallas as pl
from jax.experimental.pallas import tpu as pltpu

NEG_SLOPE = 0.01  # F.leaky_relu default negative_slope


def _leaky_relu(x):
    return jnp.where(x > 0, x, NEG_SLOPE * x)


def mlp_kernel(x_ref, cols_ref, w2_ref, b3_ref, o_ref):
    # x_ref: (1, tb) lane-dense batch row (f32).
    x_row = x_ref[...]

    cols = cols_ref[...]            # (W, 4) f32 = [w1 | b1 | b2 | w3] packed columns
    w1 = cols[:, 0:1]
    b1 = cols[:, 1:2]
    b2 = cols[:, 2:3]
    w3 = cols[:, 3:4]

    # Layer 1: Linear(1, W).  K == 1 -> pure VPU outer product (transposed activations):
    #   h1^T[j, i] = w1[j] * x[i] + b1[j]
    h = _leaky_relu(w1 * x_row + b1)                              # (W, tb) f32

    # Layer 2: Linear(W, W) on the MXU, kept transposed: h2^T = W2 @ h1^T + b2.
    # bf16 operands (MXU-native), f32 accumulation.
    h = jnp.dot(w2_ref[...], h.astype(jnp.bfloat16),
                preferred_element_type=jnp.float32) + b2          # (W, tb) f32
    h = _leaky_relu(h)

    # Layer 3: Linear(W, 1).  N == 1 -> VPU multiply + XLU sublane reduction
    # (kept off the MXU on purpose: layer 2 owns the MXU slot, VPU/XLU have slack).
    o = jnp.sum(h * w3, axis=0, keepdims=True) + b3_ref[0, 0]     # (1, tb)
    o_ref[...] = o.astype(o_ref.dtype)


def _resident_block_spec(block_shape, index_map):
    """Grid-invariant block: single-buffered (DMA'd once, stays VMEM-resident)."""
    try:
        return pl.BlockSpec(block_shape, index_map,
                            pipeline_mode=pl.Buffered(buffer_count=1))
    except TypeError:  # older jax without pipeline_mode kwarg
        return pl.BlockSpec(block_shape, index_map)


def regression_model(x, params, *, tb=512):
    """x: (B, 1) float32.  params use PyTorch nn.Linear layouts:
       w1 (W,1), b1 (W,), w2 (W,W) [out,in], b2 (W,), w3 (1,W), b3 (1,)."""
    B = x.shape[0]
    W = params["w2"].shape[0]

    # Lane-dense batch tile: multiple of 128, no larger than the (padded) batch.
    tb = max(128, (tb // 128) * 128)
    tb = min(tb, pl.cdiv(B, 128) * 128)
    nt = pl.cdiv(B, tb)
    Bp = nt * tb

    # Batch lives on the lane axis: a (1, Bp) row, tiled along lanes.
    x_row = x.reshape(B)
    if Bp != B:
        x_row = jnp.pad(x_row, (0, Bp - B))
    x_row = x_row.reshape(1, Bp)

    # Pack the four (W,) vectors into one (W, 4) block: one DMA, one padded VMEM tile.
    cols = jnp.stack(
        [params["w1"].reshape(W), params["b1"].reshape(W),
         params["b2"].reshape(W), params["w3"].reshape(W)],
        axis=1).astype(jnp.float32)                               # (W, 4) f32
    w2_bf16 = params["w2"].astype(jnp.bfloat16)                   # (W, W) bf16 MXU operand
    b3 = params["b3"].reshape(1, 1).astype(jnp.float32)           # scalar -> SMEM

    const = lambda i: (0, 0)  # weights: same whole block every grid step

    # VMEM budget: only override the default scoped limit when a large tb needs it.
    vmem_needed = (W * W * 2 + W * 4 * 4          # w2 (bf16, single-buffered) + packed cols
                   + 3 * W * tb * 4               # activations (f32 + bf16 copy + layer-2 out)
                   + 2 * 2 * tb * 4 * 2)          # double-buffered x / out tiles
    compiler_kwargs = dict(dimension_semantics=("parallel",))
    if vmem_needed > 14 * 1024 * 1024:            # v5e default scoped VMEM is 16 MiB
        compiler_kwargs["vmem_limit_bytes"] = min(
            int(vmem_needed * 1.5) + (1 << 20), 60 * 1024 * 1024)

    out_row = pl.pallas_call(
        mlp_kernel,
        out_shape=jax.ShapeDtypeStruct((1, Bp), x.dtype),
        grid_spec=pltpu.PrefetchScalarGridSpec(
            num_scalar_prefetch=0,
            grid=(nt,),
            in_specs=[
                pl.BlockSpec((1, tb), lambda i: (0, i)),            # x tile (lane-dense)
                _resident_block_spec((W, 4), const),                # packed w1|b1|b2|w3
                _resident_block_spec((W, W), const),                # w2 (out, in), bf16
                pl.BlockSpec(memory_space=pltpu.MemorySpace.SMEM),  # b3 scalar
            ],
            out_specs=pl.BlockSpec((1, tb), lambda i: (0, i)),      # lane-dense output row
        ),
        compiler_params=pltpu.CompilerParams(**compiler_kwargs),
    )(x_row, cols, w2_bf16, b3)

    return out_row.reshape(Bp, 1)[:B]


def init_params(key, width):
    """Deterministic init mimicking nn.Linear's U(-1/sqrt(fan_in), 1/sqrt(fan_in)),
    stored in PyTorch-native layouts (f32)."""
    k1, k2, k3, k4, k5, k6 = jax.random.split(key, 6)

    def u(k, shape, fan_in):
        bound = 1.0 / jnp.sqrt(jnp.float32(fan_in))
        return jax.random.uniform(k, shape, jnp.float32, -bound, bound)

    return {
        "w1": u(k1, (width, 1), 1),
        "b1": u(k2, (width,), 1),
        "w2": u(k3, (width, width), width),
        "b2": u(k4, (width,), width),
        "w3": u(k5, (1, width), width),
        "b3": u(k6, (1,), width),
    }


def reference(x, p):
    h = _leaky_relu(x @ p["w1"].T + p["b1"])
    h = _leaky_relu(h @ p["w2"].T + p["b2"])
    return h @ p["w3"].T + p["b3"]


if __name__ == "__main__":
    key = jax.random.PRNGKey(0)
    kx, kp = jax.random.split(key)

    B, WIDTH = 1024, 256          # small, TPU-tile-friendly shapes
    x = jax.random.normal(kx, (B, 1), jnp.float32)
    params = init_params(kp, WIDTH)

    out = regression_model(x, params, tb=512)   # grid=(2,): both v7x cores, resident weights
    out = jax.block_until_ready(out)

    ref = reference(x, params)
    assert out.shape == (B, 1)
    # Tolerance loosened for the bf16 MXU operands on layer 2 (f32 accumulation).
    assert jnp.allclose(out, ref, atol=2e-2, rtol=2e-2)

    print("KERNEL_OK")
</pallas_src>

<mosaic_0001>
module attributes {stable_mosaic.version = 11 : i64} {
  func.func @mlp_kernel(%arg0: i32, %arg1: memref<1x512xf32, #tpu.memory_space<vmem>>, %arg2: memref<256x4xf32, #tpu.memory_space<vmem>>, %arg3: memref<256x256xbf16, #tpu.memory_space<vmem>>, %arg4: memref<1x1xf32, #tpu.memory_space<smem>>, %arg5: memref<1x512xf32, #tpu.memory_space<vmem>>) attributes {dimension_semantics = [#tpu.dimension_semantics<parallel>], iteration_bounds = array<i64: 2>, scalar_prefetch = 0 : i64, scratch_operands = 0 : i64, tpu.core_type = #tpu.core_type<tc>, window_params = [{transform_indices = @transform_0, window_bounds = array<i64: 1, 512>}, {pipeline_mode = #tpu.pipeline_mode<synchronous>, transform_indices = @transform_1, window_bounds = array<i64: 256, 4>}, {pipeline_mode = #tpu.pipeline_mode<synchronous>, transform_indices = @transform_2, window_bounds = array<i64: 256, 256>}, {transform_indices = @transform_3, window_bounds = array<i64: 1, 1>}, {transform_indices = @transform_4, window_bounds = array<i64: 1, 512>}]} {
    %c0 = arith.constant 0 : index
    %c0_0 = arith.constant 0 : index
    %0 = vector.load %arg1[%c0, %c0_0] : memref<1x512xf32, #tpu.memory_space<vmem>>, vector<1x512xf32>
    %c0_1 = arith.constant 0 : index
    %c0_2 = arith.constant 0 : index
    %1 = vector.load %arg2[%c0_1, %c0_2] : memref<256x4xf32, #tpu.memory_space<vmem>>, vector<256x4xf32>
    %2 = vector.extract_strided_slice %1 {offsets = [0, 0], sizes = [256, 1], strides = [1, 1]} : vector<256x4xf32> to vector<256x1xf32>
    %3 = vector.extract_strided_slice %1 {offsets = [0, 1], sizes = [256, 1], strides = [1, 1]} : vector<256x4xf32> to vector<256x1xf32>
    %4 = vector.extract_strided_slice %1 {offsets = [0, 2], sizes = [256, 1], strides = [1, 1]} : vector<256x4xf32> to vector<256x1xf32>
    %5 = vector.extract_strided_slice %1 {offsets = [0, 3], sizes = [256, 1], strides = [1, 1]} : vector<256x4xf32> to vector<256x1xf32>
    %6 = vector.broadcast %2 : vector<256x1xf32> to vector<256x512xf32>
    %7 = vector.broadcast %0 : vector<1x512xf32> to vector<256x512xf32>
    %8 = arith.mulf %6, %7 : vector<256x512xf32>
    %9 = vector.broadcast %3 : vector<256x1xf32> to vector<256x512xf32>
    %10 = arith.addf %8, %9 : vector<256x512xf32>
    %cst = arith.constant 0.000000e+00 : f32
    %11 = vector.broadcast %cst : f32 to vector<256x512xf32>
    %12 = arith.cmpf ogt, %10, %11 : vector<256x512xf32>
    %cst_3 = arith.constant 0.00999999977 : f32
    %13 = vector.broadcast %cst_3 : f32 to vector<256x512xf32>
    %14 = arith.mulf %13, %10 : vector<256x512xf32>
    %15 = arith.select %12, %10, %14 : vector<256x512xi1>, vector<256x512xf32>
    %c0_4 = arith.constant 0 : index
    %c0_5 = arith.constant 0 : index
    %16 = vector.load %arg3[%c0_4, %c0_5] : memref<256x256xbf16, #tpu.memory_space<vmem>>, vector<256x256xbf16>
    %17 = arith.truncf %15 : vector<256x512xf32> to vector<256x512xbf16>
    %cst_6 = arith.constant dense<0.000000e+00> : vector<256x512xf32>
    %18 = tpu.matmul %16, %17, %cst_6 {dimension_numbers = #tpu.dot_dimension_numbers<[1], [0], [0], [1], [0, 0, 1, 1], [], []>} : vector<256x256xbf16>, vector<256x512xbf16>, vector<256x512xf32> -> vector<256x512xf32>
    %19 = vector.broadcast %4 : vector<256x1xf32> to vector<256x512xf32>
    %20 = arith.addf %18, %19 : vector<256x512xf32>
    %cst_7 = arith.constant 0.000000e+00 : f32
    %21 = vector.broadcast %cst_7 : f32 to vector<256x512xf32>
    %22 = arith.cmpf ogt, %20, %21 : vector<256x512xf32>
    %cst_8 = arith.constant 0.00999999977 : f32
    %23 = vector.broadcast %cst_8 : f32 to vector<256x512xf32>
    %24 = arith.mulf %23, %20 : vector<256x512xf32>
    %25 = arith.select %22, %20, %24 : vector<256x512xi1>, vector<256x512xf32>
    %26 = vector.broadcast %5 : vector<256x1xf32> to vector<256x512xf32>
    %27 = arith.mulf %25, %26 : vector<256x512xf32>
    %cst_9 = arith.constant dense<0.000000e+00> : vector<512xf32>
    %28 = vector.multi_reduction <add>, %27, %cst_9 [0] : vector<256x512xf32> to vector<512xf32>
    %29 = vector.shape_cast %28 : vector<512xf32> to vector<1x512xf32>
    %c0_10 = arith.constant 0 : index
    %c0_11 = arith.constant 0 : index
    %30 = memref.load %arg4[%c0_10, %c0_11] : memref<1x1xf32, #tpu.memory_space<smem>>
    %31 = vector.broadcast %30 : f32 to vector<1x512xf32>
    %32 = arith.addf %29, %31 : vector<1x512xf32>
    %c0_12 = arith.constant 0 : index
    %c0_13 = arith.constant 0 : index
    %33 = vector.load %arg5[%c0_12, %c0_13] : memref<1x512xf32, #tpu.memory_space<vmem>>, vector<1x512xf32>
    tpu.vector_store %arg5[%c0_12, %c0_13], %32 {strides = array<i32>} : memref<1x512xf32, #tpu.memory_space<vmem>>, vector<1x512xf32>,
    return
  }
  func.func @transform_0(%arg0: i32) -> (i32, i32) {
    %c0_i32 = arith.constant 0 : i32
    %c0_i32_0 = arith.constant 0 : i32
    return %c0_i32, %arg0 : i32, i32
  }
  func.func @transform_1(%arg0: i32) -> (i32, i32) {
    %c0_i32 = arith.constant 0 : i32
    %c0_i32_0 = arith.constant 0 : i32
    %c0_i32_1 = arith.constant 0 : i32
    return %c0_i32, %c0_i32_0 : i32, i32
  }
  func.func @transform_2(%arg0: i32) -> (i32, i32) {
    %c0_i32 = arith.constant 0 : i32
    %c0_i32_0 = arith.constant 0 : i32
    %c0_i32_1 = arith.constant 0 : i32
    return %c0_i32, %c0_i32_0 : i32, i32
  }
  func.func @transform_3(%arg0: i32) -> (i32, i32) {
    %c0_i32 = arith.constant 0 : i32
    %c0_i32_0 = arith.constant 0 : i32
    %c0_i32_1 = arith.constant 0 : i32
    return %c0_i32, %c0_i32_0 : i32, i32
  }
  func.func @transform_4(%arg0: i32) -> (i32, i32) {
    %c0_i32 = arith.constant 0 : i32
    %c0_i32_0 = arith.constant 0 : i32
    return %c0_i32, %arg0 : i32, i32
  }
}

</mosaic_0001>

<llo_original>
// kernel: tpu_custom_call.1
$region0: #{tpu_custom_call.1}
  #allocation0 [shape = 'u32[]', space=smem, size = 0x4, offset = 0x4, fixed_abs, tag = 'smem constant byte address 0x4 - core index']
  #allocation1 [shape = 'u32[144,128]{1,0:T(1,128)}', space=vmem, size = 0x12000, scoped, tag = 'internal scratch']
  #allocation2 [shape = 'f32[1,1]{1,0:T(1,128)S(6)}', space=smem, size = 0x200, scoped, tag = 'scoped memory for tpu_custom_call.1']
  %s0 = inlined_call_operand.vmem [shape: f32[1,1024], index: 0, kind: input, shape index: {}]
  %s1 = inlined_call_operand.vmem [shape: f32[256,4], index: 1, kind: input, shape index: {}]
  %s2 = inlined_call_operand.vmem [shape: bf16[256,256], index: 2, kind: input, shape index: {}]
  %s3 = inlined_call_operand.<no memory space> [shape: f32[1,1], index: 3, kind: input, shape index: {}]
  %s4 = inlined_call_operand.hbm [shape: f32[1,1024], index: 4, kind: output, shape index: {}]
  %s5 = sld [smem:[#allocation0]]
  $region49: #{tpu_custom_call.1} parent=0
    _
  %s7 = ssub.s32 1, %s5
  %s8 = scalar_select 0, %s7, %s5
  %9 = sst [smem:[#allocation2]] %s3
  $region1: #{tpu_custom_call.1} parent=0
    #allocation3 [shape = 'u8[4096]{0}', space=vmem, size = 0x1000, scoped, tag = 'output window, operand 0']
    #allocation4 [shape = 's32[2]{0}', space=sflag, size = 0x8, scoped, tag = 'scoped memory for tpu_custom_call.1']
    %10 = vsyncpa [#allocation4], 0
    %s11 = scalar_lea.sflag [#allocation4], 1
    %12 = vsyncpa %s11, 0
    loop: start=0, step=1, limit=4
    $region2: #{tpu_custom_call.1} parent=1 // loop_pre_header
      _
    $region3: #{tpu_custom_call.1} parent=1 // loop_header
      %s14 = sphi 0, %s18
      %p15 = scmp.ge.s32.totalorder %s14, 4
      %s24 = sphi 0, %s26
      %s27 = sphi 0, %s24
      %s28 = sphi 0, %s27
      %s44 = sphi 0, %s28
      %s48 = sphi 0, %s48
      %s50 = sphi 0, %s48
      %s51 = sphi 0, %s50
      %s65 = sphi 0, %s51
      %s69 = sphi 0, %s69
      %s71 = sphi 0, %s69
      %s72 = sphi 0, %s71
      %s86 = sphi 0, %s72
      %s90 = sphi 0, %s90
      %s92 = sphi 0, %s90
      %s93 = sphi 0, %s92
      %s107 = sphi 0, %s93
      %s113 = sphi 0, %s115
      %s116 = sphi 0, %s113
      %s117 = sphi 0, %s116
      %s133 = sphi 0, %s117
    $region4: #{tpu_custom_call.1} parent=1 // loop_header_branch
      %17 = sbr.rel (%p15) target = $region8
    $region5: #{tpu_custom_call.1} parent=1 // loop_body
      %s19 = ssub.s32 %s14, 1
      %s20 = ssub.s32 %s14, 2
      %s21 = sadd.s32 %s14, 1
      %s22 = ssub.s32 %s14, %s21
      %p23 = scmp.eq.s32.totalorder %s22, 0
      %s25 = sadd.s32 %s24, 1
      %s26 = scalar_select %p23, %s24, %s25
      %p29 = pneg %p23
      %p30 = scmp.eq.s32.totalorder %s14, 1
      %p31 = por %p29, %p30
      %p32 = scmp.ne.s32.totalorder %s24, %s27
      %p33 = scmp.eq.s32.totalorder %s14, 0
      %p34 = por %p32, %p33
      %p35 = scmp.ne.s32.totalorder %s24, %s27
      %p36 = scmp.eq.s32.totalorder %s19, 1
      %p37 = por %p35, %p36
      %p38 = scmp.ne.s32.totalorder %s27, %s28
      %p39 = scmp.eq.s32.totalorder %s19, 0
      %p40 = por %p38, %p39
      %p41 = scmp.ne.s32.totalorder %s27, %s28
      %p42 = scmp.eq.s32.totalorder %s20, 1
      %p43 = por %p41, %p42
      %p45 = scmp.ne.s32.totalorder %s28, %s44
      %p46 = scmp.eq.s32.totalorder %s20, 0
      %p47 = por %p45, %p46
      %s49 = sadd.s32 %s48, 1
      %p52 = scmp.eq.s32.totalorder %s14, 1
      %p53 = scmp.ne.s32.totalorder %s48, %s50
      %p54 = scmp.eq.s32.totalorder %s14, 0
      %p55 = por %p53, %p54
      %p56 = scmp.ne.s32.totalorder %s48, %s50
      %p57 = scmp.eq.s32.totalorder %s19, 1
      %p58 = por %p56, %p57
      %p59 = scmp.ne.s32.totalorder %s50, %s51
      %p60 = scmp.eq.s32.totalorder %s19, 0
      %p61 = por %p59, %p60
      %p62 = scmp.ne.s32.totalorder %s50, %s51
      %p63 = scmp.eq.s32.totalorder %s20, 1
      %p64 = por %p62, %p63
      %p66 = scmp.ne.s32.totalorder %s51, %s65
      %p67 = scmp.eq.s32.totalorder %s20, 0
      %p68 = por %p66, %p67
      %s70 = sadd.s32 %s69, 1
      %p73 = scmp.eq.s32.totalorder %s14, 1
      %p74 = scmp.ne.s32.totalorder %s69, %s71
      %p75 = scmp.eq.s32.totalorder %s14, 0
      %p76 = por %p74, %p75
      %p77 = scmp.ne.s32.totalorder %s69, %s71
      %p78 = scmp.eq.s32.totalorder %s19, 1
      %p79 = por %p77, %p78
      %p80 = scmp.ne.s32.totalorder %s71, %s72
      %p81 = scmp.eq.s32.totalorder %s19, 0
      %p82 = por %p80, %p81
      %p83 = scmp.ne.s32.totalorder %s71, %s72
      %p84 = scmp.eq.s32.totalorder %s20, 1
      %p85 = por %p83, %p84
      %p87 = scmp.ne.s32.totalorder %s72, %s86
      %p88 = scmp.eq.s32.totalorder %s20, 0
      %p89 = por %p87, %p88
      %s91 = sadd.s32 %s90, 1
      %p94 = scmp.eq.s32.totalorder %s14, 1
      %p95 = scmp.ne.s32.totalorder %s90, %s92
      %p96 = scmp.eq.s32.totalorder %s14, 0
      %p97 = por %p95, %p96
      %p98 = scmp.ne.s32.totalorder %s90, %s92
      %p99 = scmp.eq.s32.totalorder %s19, 1
      %p100 = por %p98, %p99
      %p101 = scmp.ne.s32.totalorder %s92, %s93
      %p102 = scmp.eq.s32.totalorder %s19, 0
      %p103 = por %p101, %p102
      %p104 = scmp.ne.s32.totalorder %s92, %s93
      %p105 = scmp.eq.s32.totalorder %s20, 1
      %p106 = por %p104, %p105
      %p108 = scmp.ne.s32.totalorder %s93, %s107
      %p109 = scmp.eq.s32.totalorder %s20, 0
      %p110 = por %p108, %p109
      %s111 = ssub.s32 %s14, %s21
      %p112 = scmp.eq.s32.totalorder %s111, 0
      %s114 = sadd.s32 %s113, 1
      %s115 = scalar_select %p112, %s113, %s114
      %p118 = pneg %p112
      %p119 = scmp.eq.s32.totalorder %s14, 1
      %p120 = por %p118, %p119
      %p121 = scmp.ne.s32.totalorder %s113, %s116
      %p122 = scmp.eq.s32.totalorder %s14, 0
      %p123 = por %p121, %p122
      %p124 = scmp.ne.s32.totalorder %s113, %s116
      %p125 = scmp.eq.s32.totalorder %s19, 1
      %p126 = por %p124, %p125
      %p127 = scmp.ne.s32.totalorder %s116, %s117
      %p128 = scmp.eq.s32.totalorder %s19, 0
      %p129 = por %p127, %p128
      %p130 = scmp.ne.s32.totalorder %s116, %s117
      %p131 = scmp.eq.s32.totalorder %s20, 1
      %p132 = por %p130, %p131
      %p134 = scmp.ne.s32.totalorder %s117, %s133
      %p135 = scmp.eq.s32.totalorder %s20, 0
      %p136 = por %p134, %p135
      %p137 = scmp.le.s32.totalorder 1, %s14
      %p138 = scmp.lt.s32.totalorder %s14, 3
      %p139 = pnand %p137, %p138
      %p140 = pneg %p139
      // Predicated region
      $region9: #{tpu_custom_call.1} parent=5 // pred_check
        _
      $region10: #{tpu_custom_call.1} parent=5 // pred_check_branch
        %142 = sbr.rel (%p139) target = $region12
      $region11: #{tpu_custom_call.1} parent=5 // pred_region
        %s143 = ssub.s32 %s14, 1
        // Predicated region
        $region13: #{tpu_custom_call.1} parent=11 // pred_check
          %p144 = pneg %p61
        $region14: #{tpu_custom_call.1} parent=11 // pred_check_branch
          %146 = sbr.rel (%p144) target = $region16
        $region15: #{tpu_custom_call.1} parent=11 // pred_region
          _
        $region16: #{tpu_custom_call.1} parent=11 // pred_fallthru
          _
        // Predicated region
        $region17: #{tpu_custom_call.1} parent=11 // pred_check
          %p147 = pneg %p82
        $region18: #{tpu_custom_call.1} parent=11 // pred_check_branch
          %149 = sbr.rel (%p147) target = $region20
        $region19: #{tpu_custom_call.1} parent=11 // pred_region
          _
        $region20: #{tpu_custom_call.1} parent=11 // pred_fallthru
          _
        // Predicated region
        $region21: #{tpu_custom_call.1} parent=11 // pred_check
          %p150 = pneg %p103
        $region22: #{tpu_custom_call.1} parent=11 // pred_check_branch
          %152 = sbr.rel (%p150) target = $region24
        $region23: #{tpu_custom_call.1} parent=11 // pred_region
          _
        $region24: #{tpu_custom_call.1} parent=11 // pred_fallthru
          _
      $region12: #{tpu_custom_call.1} parent=5 // pred_fallthru
        _
      %p153 = scmp.lt.s32.totalorder %s14, 2
      // Predicated region
      $region25: #{tpu_custom_call.1} parent=5 // pred_check
        %p154 = pneg %p153
      $region26: #{tpu_custom_call.1} parent=5 // pred_check_branch
        %156 = sbr.rel (%p154) target = $region28
      $region27: #{tpu_custom_call.1} parent=5 // pred_region
        // Predicated region
        $region29: #{tpu_custom_call.1} parent=27 // pred_check
          %p157 = pneg %p34
        $region30: #{tpu_custom_call.1} parent=27 // pred_check_branch
          %159 = sbr.rel (%p157) target = $region32
        $region31: #{tpu_custom_call.1} parent=27 // pred_region
          %s160 = smul.u32 4, %s14
          %p161 = scmp.lt.s32.totalorder %s160, 7
          %s162 = scalar_select %p161, %s160, 7
          %s163 = scalar_lea.vmem %s0, %s162
          %s164 = smul.u32 4, %s14
        $region32: #{tpu_custom_call.1} parent=27 // pred_fallthru
          _
      $region28: #{tpu_custom_call.1} parent=5 // pred_fallthru
        _
      %p165 = scmp.le.s32.totalorder 1, %s14
      %p166 = scmp.lt.s32.totalorder %s14, 3
      %p167 = pnand %p165, %p166
      %p168 = pneg %p167
      // Predicated region
      $region33: #{tpu_custom_call.1} parent=5 // pred_check
        _
      $region34: #{tpu_custom_call.1} parent=5 // pred_check_branch
        %170 = sbr.rel (%p167) target = $region36
      $region35: #{tpu_custom_call.1} parent=5 // pred_region
        %s171 = ssub.s32 %s14, 1
        %s172 = smul.u32 4, %s19
        %p173 = scmp.lt.s32.totalorder %s172, 7
        %s174 = scalar_select %p173, %s172, 7
        %s175 = scalar_lea.vmem %s0, %s174
        %p176 = pneg %p40
        %p177 = pneg %p37
        %p178 = pneg %p61
        %p179 = pneg %p58
        %p180 = pneg %p82
        %p181 = pneg %p79
        %p182 = pneg %p103
        %p183 = pneg %p100
        %p184 = pneg %p129
        %p185 = pneg %p126
        %s186 = sand.u32 %s116, 1
        %s187 = scalar_lea.sflag [#allocation4], %s186
        %s188 = sand.u32 %s116, 1
        %s189 = smul.addr %s188, 4
        %s190 = scalar_lea.vmem [#allocation3], %s189
        %s191 = smul.u32 4, %s19
        %p192 = scmp.lt.s32.totalorder %s191, 7
        %s193 = scalar_select %p192, %s191, 7
        %s194 = scalar_lea.vmem %s0, %s193
        %s195 = smul.u32 4, %s19
        %s196 = smul.u32 4, %s19
        %v197 = vld [vmem:[%s194] sm:$0xf]
        %v198 = vld [vmem:[%s1] sm:$0xff]
        %v199 = vld [vmem:[%s1 + $0x8] sm:$0xff]
        %v200 = vld [vmem:[%s1 + $0x10] sm:$0xff]
        %v201 = vld [vmem:[%s1 + $0x18] sm:$0xff]
        %v202 = vld [vmem:[%s1 + $0x20] sm:$0xff]
        %v203 = vld [vmem:[%s1 + $0x28] sm:$0xff]
        %v204 = vld [vmem:[%s1 + $0x30] sm:$0xff]
        %v205 = vld [vmem:[%s1 + $0x38] sm:$0xff]
        %v206 = vld [vmem:[%s1 + $0x40] sm:$0xff]
        %v207 = vld [vmem:[%s1 + $0x48] sm:$0xff]
        %v208 = vld [vmem:[%s1 + $0x50] sm:$0xff]
        %v209 = vld [vmem:[%s1 + $0x58] sm:$0xff]
        %v210 = vld [vmem:[%s1 + $0x60] sm:$0xff]
        %v211 = vld [vmem:[%s1 + $0x68] sm:$0xff]
        %v212 = vld [vmem:[%s1 + $0x70] sm:$0xff]
        %v213 = vld [vmem:[%s1 + $0x78] sm:$0xff]
        %v214 = vld [vmem:[%s1 + $0x80] sm:$0xff]
        %v215 = vld [vmem:[%s1 + $0x88] sm:$0xff]
        %v216 = vld [vmem:[%s1 + $0x90] sm:$0xff]
        %v217 = vld [vmem:[%s1 + $0x98] sm:$0xff]
        %v218 = vld [vmem:[%s1 + $0xa0] sm:$0xff]
        %v219 = vld [vmem:[%s1 + $0xa8] sm:$0xff]
        %v220 = vld [vmem:[%s1 + $0xb0] sm:$0xff]
        %v221 = vld [vmem:[%s1 + $0xb8] sm:$0xff]
        %v222 = vld [vmem:[%s1 + $0xc0] sm:$0xff]
        %v223 = vld [vmem:[%s1 + $0xc8] sm:$0xff]
        %v224 = vld [vmem:[%s1 + $0xd0] sm:$0xff]
        %v225 = vld [vmem:[%s1 + $0xd8] sm:$0xff]
        %v226 = vld [vmem:[%s1 + $0xe0] sm:$0xff]
        %v227 = vld [vmem:[%s1 + $0xe8] sm:$0xff]
        %v228 = vld [vmem:[%s1 + $0xf0] sm:$0xff]
        %v229 = vld [vmem:[%s1 + $0xf8] sm:$0xff]
        %231 = vset.pattern.permute.xlu0 0
        %232 = vperm.xlu0 %231, %v198
        %v233 = vpop.permute.xlu0 %232
        %236 = vset.pattern.permute.xlu0 0
        %237 = vperm.xlu0 %236, %v199
        %v238 = vpop.permute.xlu0 %237
        %241 = vset.pattern.permute.xlu0 0
        %242 = vperm.xlu0 %241, %v200
        %v243 = vpop.permute.xlu0 %242
        %246 = vset.pattern.permute.xlu0 0
        %247 = vperm.xlu0 %246, %v201
        %v248 = vpop.permute.xlu0 %247
        %251 = vset.pattern.permute.xlu0 0
        %252 = vperm.xlu0 %251, %v202
        %v253 = vpop.permute.xlu0 %252
        %256 = vset.pattern.permute.xlu0 0
        %257 = vperm.xlu0 %256, %v203
        %v258 = vpop.permute.xlu0 %257
        %261 = vset.pattern.permute.xlu0 0
        %262 = vperm.xlu0 %261, %v204
        %v263 = vpop.permute.xlu0 %262
        %266 = vset.pattern.permute.xlu0 0
        %267 = vperm.xlu0 %266, %v205
        %v268 = vpop.permute.xlu0 %267
        %271 = vset.pattern.permute.xlu0 0
        %272 = vperm.xlu0 %271, %v206
        %v273 = vpop.permute.xlu0 %272
        %276 = vset.pattern.permute.xlu0 0
        %277 = vperm.xlu0 %276, %v207
        %v278 = vpop.permute.xlu0 %277
        %281 = vset.pattern.permute.xlu0 0
        %282 = vperm.xlu0 %281, %v208
        %v283 = vpop.permute.xlu0 %282
        %286 = vset.pattern.permute.xlu0 0
        %287 = vperm.xlu0 %286, %v209
        %v288 = vpop.permute.xlu0 %287
        %291 = vset.pattern.permute.xlu0 0
        %292 = vperm.xlu0 %291, %v210
        %v293 = vpop.permute.xlu0 %292
        %296 = vset.pattern.permute.xlu0 0
        %297 = vperm.xlu0 %296, %v211
        %v298 = vpop.permute.xlu0 %297
        %301 = vset.pattern.permute.xlu0 0
        %302 = vperm.xlu0 %301, %v212
        %v303 = vpop.permute.xlu0 %302
        %306 = vset.pattern.permute.xlu0 0
        %307 = vperm.xlu0 %306, %v213
        %v308 = vpop.permute.xlu0 %307
        %311 = vset.pattern.permute.xlu0 0
        %312 = vperm.xlu0 %311, %v214
        %v313 = vpop.permute.xlu0 %312
        %316 = vset.pattern.permute.xlu0 0
        %317 = vperm.xlu0 %316, %v215
        %v318 = vpop.permute.xlu0 %317
        %321 = vset.pattern.permute.xlu0 0
        %322 = vperm.xlu0 %321, %v216
        %v323 = vpop.permute.xlu0 %322
        %326 = vset.pattern.permute.xlu0 0
        %327 = vperm.xlu0 %326, %v217
        %v328 = vpop.permute.xlu0 %327
        %331 = vset.pattern.permute.xlu0 0
        %332 = vperm.xlu0 %331, %v218
        %v333 = vpop.permute.xlu0 %332
        %336 = vset.pattern.permute.xlu0 0
        %337 = vperm.xlu0 %336, %v219
        %v338 = vpop.permute.xlu0 %337
        %341 = vset.pattern.permute.xlu0 0
        %342 = vperm.xlu0 %341, %v220
        %v343 = vpop.permute.xlu0 %342
        %346 = vset.pattern.permute.xlu0 0
        %347 = vperm.xlu0 %346, %v221
        %v348 = vpop.permute.xlu0 %347
        %351 = vset.pattern.permute.xlu0 0
        %352 = vperm.xlu0 %351, %v222
        %v353 = vpop.permute.xlu0 %352
        %356 = vset.pattern.permute.xlu0 0
        %357 = vperm.xlu0 %356, %v223
        %v358 = vpop.permute.xlu0 %357
        %361 = vset.pattern.permute.xlu0 0
        %362 = vperm.xlu0 %361, %v224
        %v363 = vpop.permute.xlu0 %362
        %366 = vset.pattern.permute.xlu0 0
        %367 = vperm.xlu0 %366, %v225
        %v368 = vpop.permute.xlu0 %367
        %371 = vset.pattern.permute.xlu0 0
        %372 = vperm.xlu0 %371, %v226
        %v373 = vpop.permute.xlu0 %372
        %376 = vset.pattern.permute.xlu0 0
        %377 = vperm.xlu0 %376, %v227
        %v378 = vpop.permute.xlu0 %377
        %381 = vset.pattern.permute.xlu0 0
        %382 = vperm.xlu0 %381, %v228
        %v383 = vpop.permute.xlu0 %382
        %386 = vset.pattern.permute.xlu0 0
        %387 = vperm.xlu0 %386, %v229
        %v388 = vpop.permute.xlu0 %387
        %v391 = vlaneseq
        %v392 = vshrl.u32 %v391, 7
        %v393 = vsub.s32 0, %v392
        %v394 = vrot.slane %v197, %v393
        %v395 = vlaneseq
        %v396 = vshrl.u32 %v395, 7
        %v397 = vsub.s32 1, %v396
        %v398 = vrot.slane %v197, %v397
        %v399 = vlaneseq
        %v400 = vshrl.u32 %v399, 7
        %v401 = vsub.s32 2, %v400
        %v402 = vrot.slane %v197, %v401
        %v403 = vlaneseq
        %v404 = vshrl.u32 %v403, 7
        %v405 = vsub.s32 3, %v404
        %v406 = vrot.slane %v197, %v405
        %v411 = vmul.f32 %v233, %v394
        %v412 = vmul.f32 %v233, %v398
        %v413 = vmul.f32 %v233, %v402
        %v414 = vmul.f32 %v233, %v406
        %v415 = vmul.f32 %v238, %v394
        %v416 = vmul.f32 %v238, %v398
        %v417 = vmul.f32 %v238, %v402
        %v418 = vmul.f32 %v238, %v406
        %v419 = vmul.f32 %v243, %v394
        %v420 = vmul.f32 %v243, %v398
        %v421 = vmul.f32 %v243, %v402
        %v422 = vmul.f32 %v243, %v406
        %v423 = vmul.f32 %v248, %v394
        %v424 = vmul.f32 %v248, %v398
        %v425 = vmul.f32 %v248, %v402
        %v426 = vmul.f32 %v248, %v406
        %v427 = vmul.f32 %v253, %v394
        %v428 = vmul.f32 %v253, %v398
        %v429 = vmul.f32 %v253, %v402
        %v430 = vmul.f32 %v253, %v406
        %v431 = vmul.f32 %v258, %v394
        %v432 = vmul.f32 %v258, %v398
        %v433 = vmul.f32 %v258, %v402
        %v434 = vmul.f32 %v258, %v406
        %v435 = vmul.f32 %v263, %v394
        %v436 = vmul.f32 %v263, %v398
        %v437 = vmul.f32 %v263, %v402
        %v438 = vmul.f32 %v263, %v406
        %v439 = vmul.f32 %v268, %v394
        %v440 = vmul.f32 %v268, %v398
        %v441 = vmul.f32 %v268, %v402
        %v442 = vmul.f32 %v268, %v406
        %v443 = vmul.f32 %v273, %v394
        %v444 = vmul.f32 %v273, %v398
        %v445 = vmul.f32 %v273, %v402
        %v446 = vmul.f32 %v273, %v406
        %v447 = vmul.f32 %v278, %v394
        %v448 = vmul.f32 %v278, %v398
        %v449 = vmul.f32 %v278, %v402
        %v450 = vmul.f32 %v278, %v406
        %v451 = vmul.f32 %v283, %v394
        %v452 = vmul.f32 %v283, %v398
        %v453 = vmul.f32 %v283, %v402
        %v454 = vmul.f32 %v283, %v406
        %v455 = vmul.f32 %v288, %v394
        %v456 = vmul.f32 %v288, %v398
        %v457 = vmul.f32 %v288, %v402
        %v458 = vmul.f32 %v288, %v406
        %v459 = vmul.f32 %v293, %v394
        %v460 = vmul.f32 %v293, %v398
        %v461 = vmul.f32 %v293, %v402
        %v462 = vmul.f32 %v293, %v406
        %v463 = vmul.f32 %v298, %v394
        %v464 = vmul.f32 %v298, %v398
        %v465 = vmul.f32 %v298, %v402
        %v466 = vmul.f32 %v298, %v406
        %v467 = vmul.f32 %v303, %v394
        %v468 = vmul.f32 %v303, %v398
        %v469 = vmul.f32 %v303, %v402
        %v470 = vmul.f32 %v303, %v406
        %v471 = vmul.f32 %v308, %v394
        %v472 = vmul.f32 %v308, %v398
        %v473 = vmul.f32 %v308, %v402
        %v474 = vmul.f32 %v308, %v406
        %v475 = vmul.f32 %v313, %v394
        %v476 = vmul.f32 %v313, %v398
        %v477 = vmul.f32 %v313, %v402
        %v478 = vmul.f32 %v313, %v406
        %v479 = vmul.f32 %v318, %v394
        %v480 = vmul.f32 %v318, %v398
        %v481 = vmul.f32 %v318, %v402
        %v482 = vmul.f32 %v318, %v406
        %v483 = vmul.f32 %v323, %v394
        %v484 = vmul.f32 %v323, %v398
        %v485 = vmul.f32 %v323, %v402
        %v486 = vmul.f32 %v323, %v406
        %v487 = vmul.f32 %v328, %v394
        %v488 = vmul.f32 %v328, %v398
        %v489 = vmul.f32 %v328, %v402
        %v490 = vmul.f32 %v328, %v406
        %v491 = vmul.f32 %v333, %v394
        %v492 = vmul.f32 %v333, %v398
        %v493 = vmul.f32 %v333, %v402
        %v494 = vmul.f32 %v333, %v406
        %v495 = vmul.f32 %v338, %v394
        %v496 = vmul.f32 %v338, %v398
        %v497 = vmul.f32 %v338, %v402
        %v498 = vmul.f32 %v338, %v406
        %v499 = vmul.f32 %v343, %v394
        %v500 = vmul.f32 %v343, %v398
        %v501 = vmul.f32 %v343, %v402
        %v502 = vmul.f32 %v343, %v406
        %v503 = vmul.f32 %v348, %v394
        %v504 = vmul.f32 %v348, %v398
        %v505 = vmul.f32 %v348, %v402
        %v506 = vmul.f32 %v348, %v406
        %v507 = vmul.f32 %v353, %v394
        %v508 = vmul.f32 %v353, %v398
        %v509 = vmul.f32 %v353, %v402
        %v510 = vmul.f32 %v353, %v406
        %v511 = vmul.f32 %v358, %v394
        %v512 = vmul.f32 %v358, %v398
        %v513 = vmul.f32 %v358, %v402
        %v514 = vmul.f32 %v358, %v406
        %v515 = vmul.f32 %v363, %v394
        %v516 = vmul.f32 %v363, %v398
        %v517 = vmul.f32 %v363, %v402
        %v518 = vmul.f32 %v363, %v406
        %v519 = vmul.f32 %v368, %v394
        %v520 = vmul.f32 %v368, %v398
        %v521 = vmul.f32 %v368, %v402
        %v522 = vmul.f32 %v368, %v406
        %v523 = vmul.f32 %v373, %v394
        %v524 = vmul.f32 %v373, %v398
        %v525 = vmul.f32 %v373, %v402
        %v526 = vmul.f32 %v373, %v406
        %v527 = vmul.f32 %v378, %v394
        %v528 = vmul.f32 %v378, %v398
        %v529 = vmul.f32 %v378, %v402
        %v530 = vmul.f32 %v378, %v406
        %v531 = vmul.f32 %v383, %v394
        %v532 = vmul.f32 %v383, %v398
        %v533 = vmul.f32 %v383, %v402
        %v534 = vmul.f32 %v383, %v406
        %v535 = vmul.f32 %v388, %v394
        %v536 = vmul.f32 %v388, %v398
        %v537 = vmul.f32 %v388, %v402
        %v538 = vmul.f32 %v388, %v406
        %539 = vset.pattern.permute.xlu0 1
        %540 = vperm.xlu0 %539, %v198
        %v541 = vpop.permute.xlu0 %540
        %543 = vset.pattern.permute.xlu0 1
        %544 = vperm.xlu0 %543, %v199
        %v545 = vpop.permute.xlu0 %544
        %547 = vset.pattern.permute.xlu0 1
        %548 = vperm.xlu0 %547, %v200
        %v549 = vpop.permute.xlu0 %548
        %551 = vset.pattern.permute.xlu0 1
        %552 = vperm.xlu0 %551, %v201
        %v553 = vpop.permute.xlu0 %552
        %555 = vset.pattern.permute.xlu0 1
        %556 = vperm.xlu0 %555, %v202
        %v557 = vpop.permute.xlu0 %556
        %559 = vset.pattern.permute.xlu0 1
        %560 = vperm.xlu0 %559, %v203
        %v561 = vpop.permute.xlu0 %560
        %563 = vset.pattern.permute.xlu0 1
        %564 = vperm.xlu0 %563, %v204
        %v565 = vpop.permute.xlu0 %564
        %567 = vset.pattern.permute.xlu0 1
        %568 = vperm.xlu0 %567, %v205
        %v569 = vpop.permute.xlu0 %568
        %571 = vset.pattern.permute.xlu0 1
        %572 = vperm.xlu0 %571, %v206
        %v573 = vpop.permute.xlu0 %572
        %575 = vset.pattern.permute.xlu0 1
        %576 = vperm.xlu0 %575, %v207
        %v577 = vpop.permute.xlu0 %576
        %579 = vset.pattern.permute.xlu0 1
        %580 = vperm.xlu0 %579, %v208
        %v581 = vpop.permute.xlu0 %580
        %583 = vset.pattern.permute.xlu0 1
        %584 = vperm.xlu0 %583, %v209
        %v585 = vpop.permute.xlu0 %584
        %587 = vset.pattern.permute.xlu0 1
        %588 = vperm.xlu0 %587, %v210
        %v589 = vpop.permute.xlu0 %588
        %591 = vset.pattern.permute.xlu0 1
        %592 = vperm.xlu0 %591, %v211
        %v593 = vpop.permute.xlu0 %592
        %595 = vset.pattern.permute.xlu0 1
        %596 = vperm.xlu0 %595, %v212
        %v597 = vpop.permute.xlu0 %596
        %599 = vset.pattern.permute.xlu0 1
        %600 = vperm.xlu0 %599, %v213
        %v601 = vpop.permute.xlu0 %600
        %603 = vset.pattern.permute.xlu0 1
        %604 = vperm.xlu0 %603, %v214
        %v605 = vpop.permute.xlu0 %604
        %607 = vset.pattern.permute.xlu0 1
        %608 = vperm.xlu0 %607, %v215
        %v609 = vpop.permute.xlu0 %608
        %611 = vset.pattern.permute.xlu0 1
        %612 = vperm.xlu0 %611, %v216
        %v613 = vpop.permute.xlu0 %612
        %615 = vset.pattern.permute.xlu0 1
        %616 = vperm.xlu0 %615, %v217
        %v617 = vpop.permute.xlu0 %616
        %619 = vset.pattern.permute.xlu0 1
        %620 = vperm.xlu0 %619, %v218
        %v621 = vpop.permute.xlu0 %620
        %623 = vset.pattern.permute.xlu0 1
        %624 = vperm.xlu0 %623, %v219
        %v625 = vpop.permute.xlu0 %624
        %627 = vset.pattern.permute.xlu0 1
        %628 = vperm.xlu0 %627, %v220
        %v629 = vpop.permute.xlu0 %628
        %631 = vset.pattern.permute.xlu0 1
        %632 = vperm.xlu0 %631, %v221
        %v633 = vpop.permute.xlu0 %632
        %635 = vset.pattern.permute.xlu0 1
        %636 = vperm.xlu0 %635, %v222
        %v637 = vpop.permute.xlu0 %636
        %639 = vset.pattern.permute.xlu0 1
        %640 = vperm.xlu0 %639, %v223
        %v641 = vpop.permute.xlu0 %640
        %643 = vset.pattern.permute.xlu0 1
        %644 = vperm.xlu0 %643, %v224
        %v645 = vpop.permute.xlu0 %644
        %647 = vset.pattern.permute.xlu0 1
        %648 = vperm.xlu0 %647, %v225
        %v649 = vpop.permute.xlu0 %648
        %651 = vset.pattern.permute.xlu0 1
        %652 = vperm.xlu0 %651, %v226
        %v653 = vpop.permute.xlu0 %652
        %655 = vset.pattern.permute.xlu0 1
        %656 = vperm.xlu0 %655, %v227
        %v657 = vpop.permute.xlu0 %656
        %659 = vset.pattern.permute.xlu0 1
        %660 = vperm.xlu0 %659, %v228
        %v661 = vpop.permute.xlu0 %660
        %663 = vset.pattern.permute.xlu0 1
        %664 = vperm.xlu0 %663, %v229
        %v665 = vpop.permute.xlu0 %664
        %v667 = vadd.f32 %v411, %v541
        %v668 = vadd.f32 %v412, %v541
        %v669 = vadd.f32 %v413, %v541
        %v670 = vadd.f32 %v414, %v541
        %v671 = vadd.f32 %v415, %v545
        %v672 = vadd.f32 %v416, %v545
        %v673 = vadd.f32 %v417, %v545
        %v674 = vadd.f32 %v418, %v545
        %v675 = vadd.f32 %v419, %v549
        %v676 = vadd.f32 %v420, %v549
        %v677 = vadd.f32 %v421, %v549
        %v678 = vadd.f32 %v422, %v549
        %v679 = vadd.f32 %v423, %v553
        %v680 = vadd.f32 %v424, %v553
        %v681 = vadd.f32 %v425, %v553
        %v682 = vadd.f32 %v426, %v553
        %v683 = vadd.f32 %v427, %v557
        %v684 = vadd.f32 %v428, %v557
        %v685 = vadd.f32 %v429, %v557
        %v686 = vadd.f32 %v430, %v557
        %v687 = vadd.f32 %v431, %v561
        %v688 = vadd.f32 %v432, %v561
        %v689 = vadd.f32 %v433, %v561
        %v690 = vadd.f32 %v434, %v561
        %v691 = vadd.f32 %v435, %v565
        %v692 = vadd.f32 %v436, %v565
        %v693 = vadd.f32 %v437, %v565
        %v694 = vadd.f32 %v438, %v565
        %v695 = vadd.f32 %v439, %v569
        %v696 = vadd.f32 %v440, %v569
        %v697 = vadd.f32 %v441, %v569
        %v698 = vadd.f32 %v442, %v569
        %v699 = vadd.f32 %v443, %v573
        %v700 = vadd.f32 %v444, %v573
        %v701 = vadd.f32 %v445, %v573
        %v702 = vadd.f32 %v446, %v573
        %v703 = vadd.f32 %v447, %v577
        %v704 = vadd.f32 %v448, %v577
        %v705 = vadd.f32 %v449, %v577
        %v706 = vadd.f32 %v450, %v577
        %v707 = vadd.f32 %v451, %v581
        %v708 = vadd.f32 %v452, %v581
        %v709 = vadd.f32 %v453, %v581
        %v710 = vadd.f32 %v454, %v581
        %v711 = vadd.f32 %v455, %v585
        %v712 = vadd.f32 %v456, %v585
        %v713 = vadd.f32 %v457, %v585
        %v714 = vadd.f32 %v458, %v585
        %v715 = vadd.f32 %v459, %v589
        %v716 = vadd.f32 %v460, %v589
        %v717 = vadd.f32 %v461, %v589
        %v718 = vadd.f32 %v462, %v589
        %v719 = vadd.f32 %v463, %v593
        %v720 = vadd.f32 %v464, %v593
        %v721 = vadd.f32 %v465, %v593
        %v722 = vadd.f32 %v466, %v593
        %v723 = vadd.f32 %v467, %v597
        %v724 = vadd.f32 %v468, %v597
        %v725 = vadd.f32 %v469, %v597
        %v726 = vadd.f32 %v470, %v597
        %v727 = vadd.f32 %v471, %v601
        %v728 = vadd.f32 %v472, %v601
        %v729 = vadd.f32 %v473, %v601
        %v730 = vadd.f32 %v474, %v601
        %v731 = vadd.f32 %v475, %v605
        %v732 = vadd.f32 %v476, %v605
        %v733 = vadd.f32 %v477, %v605
        %v734 = vadd.f32 %v478, %v605
        %v735 = vadd.f32 %v479, %v609
        %v736 = vadd.f32 %v480, %v609
        %v737 = vadd.f32 %v481, %v609
        %v738 = vadd.f32 %v482, %v609
        %v739 = vadd.f32 %v483, %v613
        %v740 = vadd.f32 %v484, %v613
        %v741 = vadd.f32 %v485, %v613
        %v742 = vadd.f32 %v486, %v613
        %v743 = vadd.f32 %v487, %v617
        %v744 = vadd.f32 %v488, %v617
        %v745 = vadd.f32 %v489, %v617
        %v746 = vadd.f32 %v490, %v617
        %v747 = vadd.f32 %v491, %v621
        %v748 = vadd.f32 %v492, %v621
        %v749 = vadd.f32 %v493, %v621
        %v750 = vadd.f32 %v494, %v621
        %v751 = vadd.f32 %v495, %v625
        %v752 = vadd.f32 %v496, %v625
        %v753 = vadd.f32 %v497, %v625
        %v754 = vadd.f32 %v498, %v625
        %v755 = vadd.f32 %v499, %v629
        %v756 = vadd.f32 %v500, %v629
        %v757 = vadd.f32 %v501, %v629
        %v758 = vadd.f32 %v502, %v629
        %v759 = vadd.f32 %v503, %v633
        %v760 = vadd.f32 %v504, %v633
        %v761 = vadd.f32 %v505, %v633
        %v762 = vadd.f32 %v506, %v633
        %v763 = vadd.f32 %v507, %v637
        %v764 = vadd.f32 %v508, %v637
        %v765 = vadd.f32 %v509, %v637
        %v766 = vadd.f32 %v510, %v637
        %v767 = vadd.f32 %v511, %v641
        %v768 = vadd.f32 %v512, %v641
        %v769 = vadd.f32 %v513, %v641
        %v770 = vadd.f32 %v514, %v641
        %v771 = vadd.f32 %v515, %v645
        %v772 = vadd.f32 %v516, %v645
        %v773 = vadd.f32 %v517, %v645
        %v774 = vadd.f32 %v518, %v645
        %v775 = vadd.f32 %v519, %v649
        %v776 = vadd.f32 %v520, %v649
        %v777 = vadd.f32 %v521, %v649
        %v778 = vadd.f32 %v522, %v649
        %v779 = vadd.f32 %v523, %v653
        %v780 = vadd.f32 %v524, %v653
        %v781 = vadd.f32 %v525, %v653
        %v782 = vadd.f32 %v526, %v653
        %v783 = vadd.f32 %v527, %v657
        %v784 = vadd.f32 %v528, %v657
        %v785 = vadd.f32 %v529, %v657
        %v786 = vadd.f32 %v530, %v657
        %v787 = vadd.f32 %v531, %v661
        %v788 = vadd.f32 %v532, %v661
        %v789 = vadd.f32 %v533, %v661
        %v790 = vadd.f32 %v534, %v661
        %v791 = vadd.f32 %v535, %v665
        %v792 = vadd.f32 %v536, %v665
        %v793 = vadd.f32 %v537, %v665
        %v794 = vadd.f32 %v538, %v665
        %vm795 = vcmp.gt.f32.partialorder %v667, 0.0
        %vm796 = vcmp.gt.f32.partialorder %v668, 0.0
        %vm797 = vcmp.gt.f32.partialorder %v669, 0.0
        %vm798 = vcmp.gt.f32.partialorder %v670, 0.0
        %vm799 = vcmp.gt.f32.partialorder %v671, 0.0
        %vm800 = vcmp.gt.f32.partialorder %v672, 0.0
        %vm801 = vcmp.gt.f32.partialorder %v673, 0.0
        %vm802 = vcmp.gt.f32.partialorder %v674, 0.0
        %vm803 = vcmp.gt.f32.partialorder %v675, 0.0
        %vm804 = vcmp.gt.f32.partialorder %v676, 0.0
        %vm805 = vcmp.gt.f32.partialorder %v677, 0.0
        %vm806 = vcmp.gt.f32.partialorder %v678, 0.0
        %vm807 = vcmp.gt.f32.partialorder %v679, 0.0
        %vm808 = vcmp.gt.f32.partialorder %v680, 0.0
        %vm809 = vcmp.gt.f32.partialorder %v681, 0.0
        %vm810 = vcmp.gt.f32.partialorder %v682, 0.0
        %vm811 = vcmp.gt.f32.partialorder %v683, 0.0
        %vm812 = vcmp.gt.f32.partialorder %v684, 0.0
        %vm813 = vcmp.gt.f32.partialorder %v685, 0.0
        %vm814 = vcmp.gt.f32.partialorder %v686, 0.0
        %vm815 = vcmp.gt.f32.partialorder %v687, 0.0
        %vm816 = vcmp.gt.f32.partialorder %v688, 0.0
        %vm817 = vcmp.gt.f32.partialorder %v689, 0.0
        %vm818 = vcmp.gt.f32.partialorder %v690, 0.0
        %vm819 = vcmp.gt.f32.partialorder %v691, 0.0
        %vm820 = vcmp.gt.f32.partialorder %v692, 0.0
        %vm821 = vcmp.gt.f32.partialorder %v693, 0.0
        %vm822 = vcmp.gt.f32.partialorder %v694, 0.0
        %vm823 = vcmp.gt.f32.partialorder %v695, 0.0
        %vm824 = vcmp.gt.f32.partialorder %v696, 0.0
        %vm825 = vcmp.gt.f32.partialorder %v697, 0.0
        %vm826 = vcmp.gt.f32.partialorder %v698, 0.0
        %vm827 = vcmp.gt.f32.partialorder %v699, 0.0
        %vm828 = vcmp.gt.f32.partialorder %v700, 0.0
        %vm829 = vcmp.gt.f32.partialorder %v701, 0.0
        %vm830 = vcmp.gt.f32.partialorder %v702, 0.0
        %vm831 = vcmp.gt.f32.partialorder %v703, 0.0
        %vm832 = vcmp.gt.f32.partialorder %v704, 0.0
        %vm833 = vcmp.gt.f32.partialorder %v705, 0.0
        %vm834 = vcmp.gt.f32.partialorder %v706, 0.0
        %vm835 = vcmp.gt.f32.partialorder %v707, 0.0
        %vm836 = vcmp.gt.f32.partialorder %v708, 0.0
        %vm837 = vcmp.gt.f32.partialorder %v709, 0.0
        %vm838 = vcmp.gt.f32.partialorder %v710, 0.0
        %vm839 = vcmp.gt.f32.partialorder %v711, 0.0
        %vm840 = vcmp.gt.f32.partialorder %v712, 0.0
        %vm841 = vcmp.gt.f32.partialorder %v713, 0.0
        %vm842 = vcmp.gt.f32.partialorder %v714, 0.0
        %vm843 = vcmp.gt.f32.partialorder %v715, 0.0
        %vm844 = vcmp.gt.f32.partialorder %v716, 0.0
        %vm845 = vcmp.gt.f32.partialorder %v717, 0.0
        %vm846 = vcmp.gt.f32.partialorder %v718, 0.0
        %vm847 = vcmp.gt.f32.partialorder %v719, 0.0
        %vm848 = vcmp.gt.f32.partialorder %v720, 0.0
        %vm849 = vcmp.gt.f32.partialorder %v721, 0.0
        %vm850 = vcmp.gt.f32.partialorder %v722, 0.0
        %vm851 = vcmp.gt.f32.partialorder %v723, 0.0
        %vm852 = vcmp.gt.f32.partialorder %v724, 0.0
        %vm853 = vcmp.gt.f32.partialorder %v725, 0.0
        %vm854 = vcmp.gt.f32.partialorder %v726, 0.0
        %vm855 = vcmp.gt.f32.partialorder %v727, 0.0
        %vm856 = vcmp.gt.f32.partialorder %v728, 0.0
        %vm857 = vcmp.gt.f32.partialorder %v729, 0.0
        %vm858 = vcmp.gt.f32.partialorder %v730, 0.0
        %vm859 = vcmp.gt.f32.partialorder %v731, 0.0
        %vm860 = vcmp.gt.f32.partialorder %v732, 0.0
        %vm861 = vcmp.gt.f32.partialorder %v733, 0.0
        %vm862 = vcmp.gt.f32.partialorder %v734, 0.0
        %vm863 = vcmp.gt.f32.partialorder %v735, 0.0
        %vm864 = vcmp.gt.f32.partialorder %v736, 0.0
        %vm865 = vcmp.gt.f32.partialorder %v737, 0.0
        %vm866 = vcmp.gt.f32.partialorder %v738, 0.0
        %vm867 = vcmp.gt.f32.partialorder %v739, 0.0
        %vm868 = vcmp.gt.f32.partialorder %v740, 0.0
        %vm869 = vcmp.gt.f32.partialorder %v741, 0.0
        %vm870 = vcmp.gt.f32.partialorder %v742, 0.0
        %vm871 = vcmp.gt.f32.partialorder %v743, 0.0
        %vm872 = vcmp.gt.f32.partialorder %v744, 0.0
        %vm873 = vcmp.gt.f32.partialorder %v745, 0.0
        %vm874 = vcmp.gt.f32.partialorder %v746, 0.0
        %vm875 = vcmp.gt.f32.partialorder %v747, 0.0
        %vm876 = vcmp.gt.f32.partialorder %v748, 0.0
        %vm877 = vcmp.gt.f32.partialorder %v749, 0.0
        %vm878 = vcmp.gt.f32.partialorder %v750, 0.0
        %vm879 = vcmp.gt.f32.partialorder %v751, 0.0
        %vm880 = vcmp.gt.f32.partialorder %v752, 0.0
        %vm881 = vcmp.gt.f32.partialorder %v753, 0.0
        %vm882 = vcmp.gt.f32.partialorder %v754, 0.0
        %vm883 = vcmp.gt.f32.partialorder %v755, 0.0
        %vm884 = vcmp.gt.f32.partialorder %v756, 0.0
        %vm885 = vcmp.gt.f32.partialorder %v757, 0.0
        %vm886 = vcmp.gt.f32.partialorder %v758, 0.0
        %vm887 = vcmp.gt.f32.partialorder %v759, 0.0
        %vm888 = vcmp.gt.f32.partialorder %v760, 0.0
        %vm889 = vcmp.gt.f32.partialorder %v761, 0.0
        %vm890 = vcmp.gt.f32.partialorder %v762, 0.0
        %vm891 = vcmp.gt.f32.partialorder %v763, 0.0
        %vm892 = vcmp.gt.f32.partialorder %v764, 0.0
        %vm893 = vcmp.gt.f32.partialorder %v765, 0.0
        %vm894 = vcmp.gt.f32.partialorder %v766, 0.0
        %vm895 = vcmp.gt.f32.partialorder %v767, 0.0
        %vm896 = vcmp.gt.f32.partialorder %v768, 0.0
        %vm897 = vcmp.gt.f32.partialorder %v769, 0.0
        %vm898 = vcmp.gt.f32.partialorder %v770, 0.0
        %vm899 = vcmp.gt.f32.partialorder %v771, 0.0
        %vm900 = vcmp.gt.f32.partialorder %v772, 0.0
        %vm901 = vcmp.gt.f32.partialorder %v773, 0.0
        %vm902 = vcmp.gt.f32.partialorder %v774, 0.0
        %vm903 = vcmp.gt.f32.partialorder %v775, 0.0
        %vm904 = vcmp.gt.f32.partialorder %v776, 0.0
        %vm905 = vcmp.gt.f32.partialorder %v777, 0.0
        %vm906 = vcmp.gt.f32.partialorder %v778, 0.0
        %vm907 = vcmp.gt.f32.partialorder %v779, 0.0
        %vm908 = vcmp.gt.f32.partialorder %v780, 0.0
        %vm909 = vcmp.gt.f32.partialorder %v781, 0.0
        %vm910 = vcmp.gt.f32.partialorder %v782, 0.0
        %vm911 = vcmp.gt.f32.partialorder %v783, 0.0
        %vm912 = vcmp.gt.f32.partialorder %v784, 0.0
        %vm913 = vcmp.gt.f32.partialorder %v785, 0.0
        %vm914 = vcmp.gt.f32.partialorder %v786, 0.0
        %vm915 = vcmp.gt.f32.partialorder %v787, 0.0
        %vm916 = vcmp.gt.f32.partialorder %v788, 0.0
        %vm917 = vcmp.gt.f32.partialorder %v789, 0.0
        %vm918 = vcmp.gt.f32.partialorder %v790, 0.0
        %vm919 = vcmp.gt.f32.partialorder %v791, 0.0
        %vm920 = vcmp.gt.f32.partialorder %v792, 0.0
        %vm921 = vcmp.gt.f32.partialorder %v793, 0.0
        %vm922 = vcmp.gt.f32.partialorder %v794, 0.0
        %v923 = vmul.f32 %v667, 0.01
        %v924 = vmul.f32 %v668, 0.01
        %v925 = vmul.f32 %v669, 0.01
        %v926 = vmul.f32 %v670, 0.01
        %v927 = vmul.f32 %v671, 0.01
        %v928 = vmul.f32 %v672, 0.01
        %v929 = vmul.f32 %v673, 0.01
        %v930 = vmul.f32 %v674, 0.01
        %v931 = vmul.f32 %v675, 0.01
        %v932 = vmul.f32 %v676, 0.01
        %v933 = vmul.f32 %v677, 0.01
        %v934 = vmul.f32 %v678, 0.01
        %v935 = vmul.f32 %v679, 0.01
        %v936 = vmul.f32 %v680, 0.01
        %v937 = vmul.f32 %v681, 0.01
        %v938 = vmul.f32 %v682, 0.01
        %v939 = vmul.f32 %v683, 0.01
        %v940 = vmul.f32 %v684, 0.01
        %v941 = vmul.f32 %v685, 0.01
        %v942 = vmul.f32 %v686, 0.01
        %v943 = vmul.f32 %v687, 0.01
        %v944 = vmul.f32 %v688, 0.01
        %v945 = vmul.f32 %v689, 0.01
        %v946 = vmul.f32 %v690, 0.01
        %v947 = vmul.f32 %v691, 0.01
        %v948 = vmul.f32 %v692, 0.01
        %v949 = vmul.f32 %v693, 0.01
        %v950 = vmul.f32 %v694, 0.01
        %v951 = vmul.f32 %v695, 0.01
        %v952 = vmul.f32 %v696, 0.01
        %v953 = vmul.f32 %v697, 0.01
        %v954 = vmul.f32 %v698, 0.01
        %v955 = vmul.f32 %v699, 0.01
        %v956 = vmul.f32 %v700, 0.01
        %v957 = vmul.f32 %v701, 0.01
        %v958 = vmul.f32 %v702, 0.01
        %v959 = vmul.f32 %v703, 0.01
        %v960 = vmul.f32 %v704, 0.01
        %v961 = vmul.f32 %v705, 0.01
        %v962 = vmul.f32 %v706, 0.01
        %v963 = vmul.f32 %v707, 0.01
        %v964 = vmul.f32 %v708, 0.01
        %v965 = vmul.f32 %v709, 0.01
        %v966 = vmul.f32 %v710, 0.01
        %v967 = vmul.f32 %v711, 0.01
        %v968 = vmul.f32 %v712, 0.01
        %v969 = vmul.f32 %v713, 0.01
        %v970 = vmul.f32 %v714, 0.01
        %v971 = vmul.f32 %v715, 0.01
        %v972 = vmul.f32 %v716, 0.01
        %v973 = vmul.f32 %v717, 0.01
        %v974 = vmul.f32 %v718, 0.01
        %v975 = vmul.f32 %v719, 0.01
        %v976 = vmul.f32 %v720, 0.01
        %v977 = vmul.f32 %v721, 0.01
        %v978 = vmul.f32 %v722, 0.01
        %v979 = vmul.f32 %v723, 0.01
        %v980 = vmul.f32 %v724, 0.01
        %v981 = vmul.f32 %v725, 0.01
        %v982 = vmul.f32 %v726, 0.01
        %v983 = vmul.f32 %v727, 0.01
        %v984 = vmul.f32 %v728, 0.01
        %v985 = vmul.f32 %v729, 0.01
        %v986 = vmul.f32 %v730, 0.01
        %v987 = vmul.f32 %v731, 0.01
        %v988 = vmul.f32 %v732, 0.01
        %v989 = vmul.f32 %v733, 0.01
        %v990 = vmul.f32 %v734, 0.01
        %v991 = vmul.f32 %v735, 0.01
        %v992 = vmul.f32 %v736, 0.01
        %v993 = vmul.f32 %v737, 0.01
        %v994 = vmul.f32 %v738, 0.01
        %v995 = vmul.f32 %v739, 0.01
        %v996 = vmul.f32 %v740, 0.01
        %v997 = vmul.f32 %v741, 0.01
        %v998 = vmul.f32 %v742, 0.01
        %v999 = vmul.f32 %v743, 0.01
        %v1000 = vmul.f32 %v744, 0.01
        %v1001 = vmul.f32 %v745, 0.01
        %v1002 = vmul.f32 %v746, 0.01
        %v1003 = vmul.f32 %v747, 0.01
        %v1004 = vmul.f32 %v748, 0.01
        %v1005 = vmul.f32 %v749, 0.01
        %v1006 = vmul.f32 %v750, 0.01
        %v1007 = vmul.f32 %v751, 0.01
        %v1008 = vmul.f32 %v752, 0.01
        %v1009 = vmul.f32 %v753, 0.01
        %v1010 = vmul.f32 %v754, 0.01
        %v1011 = vmul.f32 %v755, 0.01
        %v1012 = vmul.f32 %v756, 0.01
        %v1013 = vmul.f32 %v757, 0.01
        %v1014 = vmul.f32 %v758, 0.01
        %v1015 = vmul.f32 %v759, 0.01
        %v1016 = vmul.f32 %v760, 0.01
        %v1017 = vmul.f32 %v761, 0.01
        %v1018 = vmul.f32 %v762, 0.01
        %v1019 = vmul.f32 %v763, 0.01
        %v1020 = vmul.f32 %v764, 0.01
        %v1021 = vmul.f32 %v765, 0.01
        %v1022 = vmul.f32 %v766, 0.01
        %v1023 = vmul.f32 %v767, 0.01
        %v1024 = vmul.f32 %v768, 0.01
        %v1025 = vmul.f32 %v769, 0.01
        %v1026 = vmul.f32 %v770, 0.01
        %v1027 = vmul.f32 %v771, 0.01
        %v1028 = vmul.f32 %v772, 0.01
        %v1029 = vmul.f32 %v773, 0.01
        %v1030 = vmul.f32 %v774, 0.01
        %v1031 = vmul.f32 %v775, 0.01
        %v1032 = vmul.f32 %v776, 0.01
        %v1033 = vmul.f32 %v777, 0.01
        %v1034 = vmul.f32 %v778, 0.01
        %v1035 = vmul.f32 %v779, 0.01
        %v1036 = vmul.f32 %v780, 0.01
        %v1037 = vmul.f32 %v781, 0.01
        %v1038 = vmul.f32 %v782, 0.01
        %v1039 = vmul.f32 %v783, 0.01
        %v1040 = vmul.f32 %v784, 0.01
        %v1041 = vmul.f32 %v785, 0.01
        %v1042 = vmul.f32 %v786, 0.01
        %v1043 = vmul.f32 %v787, 0.01
        %v1044 = vmul.f32 %v788, 0.01
        %v1045 = vmul.f32 %v789, 0.01
        %v1046 = vmul.f32 %v790, 0.01
        %v1047 = vmul.f32 %v791, 0.01
        %v1048 = vmul.f32 %v792, 0.01
        %v1049 = vmul.f32 %v793, 0.01
        %v1050 = vmul.f32 %v794, 0.01
        %v1051 = vsel %vm795, %v667, %v923
        %v1052 = vsel %vm796, %v668, %v924
        %v1053 = vsel %vm797, %v669, %v925
        %v1054 = vsel %vm798, %v670, %v926
        %v1055 = vsel %vm799, %v671, %v927
        %v1056 = vsel %vm800, %v672, %v928
        %v1057 = vsel %vm801, %v673, %v929
        %v1058 = vsel %vm802, %v674, %v930
        %v1059 = vsel %vm803, %v675, %v931
        %v1060 = vsel %vm804, %v676, %v932
        %v1061 = vsel %vm805, %v677, %v933
        %v1062 = vsel %vm806, %v678, %v934
        %v1063 = vsel %vm807, %v679, %v935
        %v1064 = vsel %vm808, %v680, %v936
        %v1065 = vsel %vm809, %v681, %v937
        %v1066 = vsel %vm810, %v682, %v938
        %v1067 = vsel %vm811, %v683, %v939
        %v1068 = vsel %vm812, %v684, %v940
        %v1069 = vsel %vm813, %v685, %v941
        %v1070 = vsel %vm814, %v686, %v942
        %v1071 = vsel %vm815, %v687, %v943
        %v1072 = vsel %vm816, %v688, %v944
        %v1073 = vsel %vm817, %v689, %v945
        %v1074 = vsel %vm818, %v690, %v946
        %v1075 = vsel %vm819, %v691, %v947
        %v1076 = vsel %vm820, %v692, %v948
        %v1077 = vsel %vm821, %v693, %v949
        %v1078 = vsel %vm822, %v694, %v950
        %v1079 = vsel %vm823, %v695, %v951
        %v1080 = vsel %vm824, %v696, %v952
        %v1081 = vsel %vm825, %v697, %v953
        %v1082 = vsel %vm826, %v698, %v954
        %v1083 = vsel %vm827, %v699, %v955
        %v1084 = vsel %vm828, %v700, %v956
        %v1085 = vsel %vm829, %v701, %v957
        %v1086 = vsel %vm830, %v702, %v958
        %v1087 = vsel %vm831, %v703, %v959
        %v1088 = vsel %vm832, %v704, %v960
        %v1089 = vsel %vm833, %v705, %v961
        %v1090 = vsel %vm834, %v706, %v962
        %v1091 = vsel %vm835, %v707, %v963
        %v1092 = vsel %vm836, %v708, %v964
        %v1093 = vsel %vm837, %v709, %v965
        %v1094 = vsel %vm838, %v710, %v966
        %v1095 = vsel %vm839, %v711, %v967
        %v1096 = vsel %vm840, %v712, %v968
        %v1097 = vsel %vm841, %v713, %v969
        %v1098 = vsel %vm842, %v714, %v970
        %v1099 = vsel %vm843, %v715, %v971
        %v1100 = vsel %vm844, %v716, %v972
        %v1101 = vsel %vm845, %v717, %v973
        %v1102 = vsel %vm846, %v718, %v974
        %v1103 = vsel %vm847, %v719, %v975
        %v1104 = vsel %vm848, %v720, %v976
        %v1105 = vsel %vm849, %v721, %v977
        %v1106 = vsel %vm850, %v722, %v978
        %v1107 = vsel %vm851, %v723, %v979
        %v1108 = vsel %vm852, %v724, %v980
        %v1109 = vsel %vm853, %v725, %v981
        %v1110 = vsel %vm854, %v726, %v982
        %v1111 = vsel %vm855, %v727, %v983
        %v1112 = vsel %vm856, %v728, %v984
        %v1113 = vsel %vm857, %v729, %v985
        %v1114 = vsel %vm858, %v730, %v986
        %v1115 = vsel %vm859, %v731, %v987
        %v1116 = vsel %vm860, %v732, %v988
        %v1117 = vsel %vm861, %v733, %v989
        %v1118 = vsel %vm862, %v734, %v990
        %v1119 = vsel %vm863, %v735, %v991
        %v1120 = vsel %vm864, %v736, %v992
        %v1121 = vsel %vm865, %v737, %v993
        %v1122 = vsel %vm866, %v738, %v994
        %v1123 = vsel %vm867, %v739, %v995
        %v1124 = vsel %vm868, %v740, %v996
        %v1125 = vsel %vm869, %v741, %v997
        %v1126 = vsel %vm870, %v742, %v998
        %v1127 = vsel %vm871, %v743, %v999
        %v1128 = vsel %vm872, %v744, %v1000
        %v1129 = vsel %vm873, %v745, %v1001
        %v1130 = vsel %vm874, %v746, %v1002
        %v1131 = vsel %vm875, %v747, %v1003
        %v1132 = vsel %vm876, %v748, %v1004
        %v1133 = vsel %vm877, %v749, %v1005
        %v1134 = vsel %vm878, %v750, %v1006
        %v1135 = vsel %vm879, %v751, %v1007
        %v1136 = vsel %vm880, %v752, %v1008
        %v1137 = vsel %vm881, %v753, %v1009
        %v1138 = vsel %vm882, %v754, %v1010
        %v1139 = vsel %vm883, %v755, %v1011
        %v1140 = vsel %vm884, %v756, %v1012
        %v1141 = vsel %vm885, %v757, %v1013
        %v1142 = vsel %vm886, %v758, %v1014
        %v1143 = vsel %vm887, %v759, %v1015
        %v1144 = vsel %vm888, %v760, %v1016
        %v1145 = vsel %vm889, %v761, %v1017
        %v1146 = vsel %vm890, %v762, %v1018
        %v1147 = vsel %vm891, %v763, %v1019
        %v1148 = vsel %vm892, %v764, %v1020
        %v1149 = vsel %vm893, %v765, %v1021
        %v1150 = vsel %vm894, %v766, %v1022
        %v1151 = vsel %vm895, %v767, %v1023
        %v1152 = vsel %vm896, %v768, %v1024
        %v1153 = vsel %vm897, %v769, %v1025
        %v1154 = vsel %vm898, %v770, %v1026
        %v1155 = vsel %vm899, %v771, %v1027
        %v1156 = vsel %vm900, %v772, %v1028
        %v1157 = vsel %vm901, %v773, %v1029
        %v1158 = vsel %vm902, %v774, %v1030
        %v1159 = vsel %vm903, %v775, %v1031
        %v1160 = vsel %vm904, %v776, %v1032
        %v1161 = vsel %vm905, %v777, %v1033
        %v1162 = vsel %vm906, %v778, %v1034
        %v1163 = vsel %vm907, %v779, %v1035
        %v1164 = vsel %vm908, %v780, %v1036
        %v1165 = vsel %vm909, %v781, %v1037
        %v1166 = vsel %vm910, %v782, %v1038
        %v1167 = vsel %vm911, %v783, %v1039
        %v1168 = vsel %vm912, %v784, %v1040
        %v1169 = vsel %vm913, %v785, %v1041
        %v1170 = vsel %vm914, %v786, %v1042
        %v1171 = vsel %vm915, %v787, %v1043
        %v1172 = vsel %vm916, %v788, %v1044
        %v1173 = vsel %vm917, %v789, %v1045
        %v1174 = vsel %vm918, %v790, %v1046
        %v1175 = vsel %vm919, %v791, %v1047
        %v1176 = vsel %vm920, %v792, %v1048
        %v1177 = vsel %vm921, %v793, %v1049
        %v1178 = vsel %vm922, %v794, %v1050
        %v1179 = vld [vmem:[%s2] sm:$0xff]
        %v1180 = vld [vmem:[%s2 + $0x8] sm:$0xff]
        %v1181 = vld [vmem:[%s2 + $0x10] sm:$0xff]
        %v1182 = vld [vmem:[%s2 + $0x18] sm:$0xff]
        %v1183 = vld [vmem:[%s2 + $0x20] sm:$0xff]
        %v1184 = vld [vmem:[%s2 + $0x28] sm:$0xff]
        %v1185 = vld [vmem:[%s2 + $0x30] sm:$0xff]
        %v1186 = vld [vmem:[%s2 + $0x38] sm:$0xff]
        %v1187 = vld [vmem:[%s2 + $0x40] sm:$0xff]
        %v1188 = vld [vmem:[%s2 + $0x48] sm:$0xff]
        %v1189 = vld [vmem:[%s2 + $0x50] sm:$0xff]
        %v1190 = vld [vmem:[%s2 + $0x58] sm:$0xff]
        %v1191 = vld [vmem:[%s2 + $0x60] sm:$0xff]
        %v1192 = vld [vmem:[%s2 + $0x68] sm:$0xff]
        %v1193 = vld [vmem:[%s2 + $0x70] sm:$0xff]
        %v1194 = vld [vmem:[%s2 + $0x78] sm:$0xff]
        %v1195 = vld [vmem:[%s2 + $0x80] sm:$0xff]
        %v1196 = vld [vmem:[%s2 + $0x88] sm:$0xff]
        %v1197 = vld [vmem:[%s2 + $0x90] sm:$0xff]
        %v1198 = vld [vmem:[%s2 + $0x98] sm:$0xff]
        %v1199 = vld [vmem:[%s2 + $0xa0] sm:$0xff]
        %v1200 = vld [vmem:[%s2 + $0xa8] sm:$0xff]
        %v1201 = vld [vmem:[%s2 + $0xb0] sm:$0xff]
        %v1202 = vld [vmem:[%s2 + $0xb8] sm:$0xff]
        %v1203 = vld [vmem:[%s2 + $0xc0] sm:$0xff]
        %v1204 = vld [vmem:[%s2 + $0xc8] sm:$0xff]
        %v1205 = vld [vmem:[%s2 + $0xd0] sm:$0xff]
        %v1206 = vld [vmem:[%s2 + $0xd8] sm:$0xff]
        %v1207 = vld [vmem:[%s2 + $0xe0] sm:$0xff]
        %v1208 = vld [vmem:[%s2 + $0xe8] sm:$0xff]
        %v1209 = vld [vmem:[%s2 + $0xf0] sm:$0xff]
        %v1210 = vld [vmem:[%s2 + $0xf8] sm:$0xff]
        %v1211 = vpack.c.bf16 %v1055, %v1051
        %v1212 = vpack.c.bf16 %v1056, %v1052
        %v1213 = vpack.c.bf16 %v1057, %v1053
        %v1214 = vpack.c.bf16 %v1058, %v1054
        %v1215 = vpack.c.bf16 %v1063, %v1059
        %v1216 = vpack.c.bf16 %v1064, %v1060
        %v1217 = vpack.c.bf16 %v1065, %v1061
        %v1218 = vpack.c.bf16 %v1066, %v1062
        %v1219 = vpack.c.bf16 %v1071, %v1067
        %v1220 = vpack.c.bf16 %v1072, %v1068
        %v1221 = vpack.c.bf16 %v1073, %v1069
        %v1222 = vpack.c.bf16 %v1074, %v1070
        %v1223 = vpack.c.bf16 %v1079, %v1075
        %v1224 = vpack.c.bf16 %v1080, %v1076
        %v1225 = vpack.c.bf16 %v1081, %v1077
        %v1226 = vpack.c.bf16 %v1082, %v1078
        %v1227 = vpack.c.bf16 %v1087, %v1083
        %v1228 = vpack.c.bf16 %v1088, %v1084
        %v1229 = vpack.c.bf16 %v1089, %v1085
        %v1230 = vpack.c.bf16 %v1090, %v1086
        %v1231 = vpack.c.bf16 %v1095, %v1091
        %v1232 = vpack.c.bf16 %v1096, %v1092
        %v1233 = vpack.c.bf16 %v1097, %v1093
        %v1234 = vpack.c.bf16 %v1098, %v1094
        %v1235 = vpack.c.bf16 %v1103, %v1099
        %v1236 = vpack.c.bf16 %v1104, %v1100
        %v1237 = vpack.c.bf16 %v1105, %v1101
        %v1238 = vpack.c.bf16 %v1106, %v1102
        %v1239 = vpack.c.bf16 %v1111, %v1107
        %v1240 = vpack.c.bf16 %v1112, %v1108
        %v1241 = vpack.c.bf16 %v1113, %v1109
        %v1242 = vpack.c.bf16 %v1114, %v1110
        %v1243 = vpack.c.bf16 %v1119, %v1115
        %v1244 = vpack.c.bf16 %v1120, %v1116
        %v1245 = vpack.c.bf16 %v1121, %v1117
        %v1246 = vpack.c.bf16 %v1122, %v1118
        %v1247 = vpack.c.bf16 %v1127, %v1123
        %v1248 = vpack.c.bf16 %v1128, %v1124
        %v1249 = vpack.c.bf16 %v1129, %v1125
        %v1250 = vpack.c.bf16 %v1130, %v1126
        %v1251 = vpack.c.bf16 %v1135, %v1131
        %v1252 = vpack.c.bf16 %v1136, %v1132
        %v1253 = vpack.c.bf16 %v1137, %v1133
        %v1254 = vpack.c.bf16 %v1138, %v1134
        %v1255 = vpack.c.bf16 %v1143, %v1139
        %v1256 = vpack.c.bf16 %v1144, %v1140
        %v1257 = vpack.c.bf16 %v1145, %v1141
        %v1258 = vpack.c.bf16 %v1146, %v1142
        %v1259 = vpack.c.bf16 %v1151, %v1147
        %v1260 = vpack.c.bf16 %v1152, %v1148
        %v1261 = vpack.c.bf16 %v1153, %v1149
        %v1262 = vpack.c.bf16 %v1154, %v1150
        %v1263 = vpack.c.bf16 %v1159, %v1155
        %v1264 = vpack.c.bf16 %v1160, %v1156
        %v1265 = vpack.c.bf16 %v1161, %v1157
        %v1266 = vpack.c.bf16 %v1162, %v1158
        %v1267 = vpack.c.bf16 %v1167, %v1163
        %v1268 = vpack.c.bf16 %v1168, %v1164
        %v1269 = vpack.c.bf16 %v1169, %v1165
        %v1270 = vpack.c.bf16 %v1170, %v1166
        %v1271 = vpack.c.bf16 %v1175, %v1171
        %v1272 = vpack.c.bf16 %v1176, %v1172
        %v1273 = vpack.c.bf16 %v1177, %v1173
        %v1274 = vpack.c.bf16 %v1178, %v1174
        %1275 = vset.pattern.permute.xlu0 2
        %1276 = vperm.xlu0 %1275, %v198
        %v1277 = vpop.permute.xlu0 %1276
        %1279 = vset.pattern.permute.xlu0 2
        %1280 = vperm.xlu0 %1279, %v199
        %v1281 = vpop.permute.xlu0 %1280
        %1283 = vset.pattern.permute.xlu0 2
        %1284 = vperm.xlu0 %1283, %v200
        %v1285 = vpop.permute.xlu0 %1284
        %1287 = vset.pattern.permute.xlu0 2
        %1288 = vperm.xlu0 %1287, %v201
        %v1289 = vpop.permute.xlu0 %1288
        %1291 = vset.pattern.permute.xlu0 2
        %1292 = vperm.xlu0 %1291, %v202
        %v1293 = vpop.permute.xlu0 %1292
        %1295 = vset.pattern.permute.xlu0 2
        %1296 = vperm.xlu0 %1295, %v203
        %v1297 = vpop.permute.xlu0 %1296
        %1299 = vset.pattern.permute.xlu0 2
        %1300 = vperm.xlu0 %1299, %v204
        %v1301 = vpop.permute.xlu0 %1300
        %1303 = vset.pattern.permute.xlu0 2
        %1304 = vperm.xlu0 %1303, %v205
        %v1305 = vpop.permute.xlu0 %1304
        %1307 = vset.pattern.permute.xlu0 2
        %1308 = vperm.xlu0 %1307, %v206
        %v1309 = vpop.permute.xlu0 %1308
        %1311 = vset.pattern.permute.xlu0 2
        %1312 = vperm.xlu0 %1311, %v207
        %v1313 = vpop.permute.xlu0 %1312
        %1315 = vset.pattern.permute.xlu0 2
        %1316 = vperm.xlu0 %1315, %v208
        %v1317 = vpop.permute.xlu0 %1316
        %1319 = vset.pattern.permute.xlu0 2
        %1320 = vperm.xlu0 %1319, %v209
        %v1321 = vpop.permute.xlu0 %1320
        %1323 = vset.pattern.permute.xlu0 2
        %1324 = vperm.xlu0 %1323, %v210
        %v1325 = vpop.permute.xlu0 %1324
        %1327 = vset.pattern.permute.xlu0 2
        %1328 = vperm.xlu0 %1327, %v211
        %v1329 = vpop.permute.xlu0 %1328
        %1331 = vset.pattern.permute.xlu0 2
        %1332 = vperm.xlu0 %1331, %v212
        %v1333 = vpop.permute.xlu0 %1332
        %1335 = vset.pattern.permute.xlu0 2
        %1336 = vperm.xlu0 %1335, %v213
        %v1337 = vpop.permute.xlu0 %1336
        %1339 = vset.pattern.permute.xlu0 2
        %1340 = vperm.xlu0 %1339, %v214
        %v1341 = vpop.permute.xlu0 %1340
        %1343 = vset.pattern.permute.xlu0 2
        %1344 = vperm.xlu0 %1343, %v215
        %v1345 = vpop.permute.xlu0 %1344
        %1347 = vset.pattern.permute.xlu0 2
        %1348 = vperm.xlu0 %1347, %v216
        %v1349 = vpop.permute.xlu0 %1348
        %1351 = vset.pattern.permute.xlu0 2
        %1352 = vperm.xlu0 %1351, %v217
        %v1353 = vpop.permute.xlu0 %1352
        %1355 = vset.pattern.permute.xlu0 2
        %1356 = vperm.xlu0 %1355, %v218
        %v1357 = vpop.permute.xlu0 %1356
        %1359 = vset.pattern.permute.xlu0 2
        %1360 = vperm.xlu0 %1359, %v219
        %v1361 = vpop.permute.xlu0 %1360
        %1363 = vset.pattern.permute.xlu0 2
        %1364 = vperm.xlu0 %1363, %v220
        %v1365 = vpop.permute.xlu0 %1364
        %1367 = vset.pattern.permute.xlu0 2
        %1368 = vperm.xlu0 %1367, %v221
        %v1369 = vpop.permute.xlu0 %1368
        %1371 = vset.pattern.permute.xlu0 2
        %1372 = vperm.xlu0 %1371, %v222
        %v1373 = vpop.permute.xlu0 %1372
        %1375 = vset.pattern.permute.xlu0 2
        %1376 = vperm.xlu0 %1375, %v223
        %v1377 = vpop.permute.xlu0 %1376
        %1379 = vset.pattern.permute.xlu0 2
        %1380 = vperm.xlu0 %1379, %v224
        %v1381 = vpop.permute.xlu0 %1380
        %1383 = vset.pattern.permute.xlu0 2
        %1384 = vperm.xlu0 %1383, %v225
        %v1385 = vpop.permute.xlu0 %1384
        %1387 = vset.pattern.permute.xlu0 2
        %1388 = vperm.xlu0 %1387, %v226
        %v1389 = vpop.permute.xlu0 %1388
        %1391 = vset.pattern.permute.xlu0 2
        %1392 = vperm.xlu0 %1391, %v227
        %v1393 = vpop.permute.xlu0 %1392
        %1395 = vset.pattern.permute.xlu0 2
        %1396 = vperm.xlu0 %1395, %v228
        %v1397 = vpop.permute.xlu0 %1396
        %1399 = vset.pattern.permute.xlu0 2
        %1400 = vperm.xlu0 %1399, %v229
        %v1401 = vpop.permute.xlu0 %1400
        %v1435 = vunpack.c.l.b16 %v1179
        %v1436 = vunpack.c.h.b16 %v1179
        %v1437 = vunpack.c.l.b16 %v1180
        %v1438 = vunpack.c.h.b16 %v1180
        %v1439 = vunpack.c.l.b16 %v1181
        %v1440 = vunpack.c.h.b16 %v1181
        %v1441 = vunpack.c.l.b16 %v1182
        %v1442 = vunpack.c.h.b16 %v1182
        %v1443 = vunpack.c.l.b16 %v1183
        %v1444 = vunpack.c.h.b16 %v1183
        %v1445 = vunpack.c.l.b16 %v1184
        %v1446 = vunpack.c.h.b16 %v1184
        %v1447 = vunpack.c.l.b16 %v1185
        %v1448 = vunpack.c.h.b16 %v1185
        %v1449 = vunpack.c.l.b16 %v1186
        %v1450 = vunpack.c.h.b16 %v1186
        %v1451 = vunpack.c.l.b16 %v1187
        %v1452 = vunpack.c.h.b16 %v1187
        %v1453 = vunpack.c.l.b16 %v1188
        %v1454 = vunpack.c.h.b16 %v1188
        %v1455 = vunpack.c.l.b16 %v1189
        %v1456 = vunpack.c.h.b16 %v1189
        %v1457 = vunpack.c.l.b16 %v1190
        %v1458 = vunpack.c.h.b16 %v1190
        %v1459 = vunpack.c.l.b16 %v1191
        %v1460 = vunpack.c.h.b16 %v1191
        %v1461 = vunpack.c.l.b16 %v1192
        %v1462 = vunpack.c.h.b16 %v1192
        %v1463 = vunpack.c.l.b16 %v1193
        %v1464 = vunpack.c.h.b16 %v1193
        %v1465 = vunpack.c.l.b16 %v1194
        %v1466 = vunpack.c.h.b16 %v1194
        %v1467 = vunpack.c.l.b16 %v1195
        %v1468 = vunpack.c.h.b16 %v1195
        %v1469 = vunpack.c.l.b16 %v1196
        %v1470 = vunpack.c.h.b16 %v1196
        %v1471 = vunpack.c.l.b16 %v1197
        %v1472 = vunpack.c.h.b16 %v1197
        %v1473 = vunpack.c.l.b16 %v1198
        %v1474 = vunpack.c.h.b16 %v1198
        %v1475 = vunpack.c.l.b16 %v1199
        %v1476 = vunpack.c.h.b16 %v1199
        %v1477 = vunpack.c.l.b16 %v1200
        %v1478 = vunpack.c.h.b16 %v1200
        %v1479 = vunpack.c.l.b16 %v1201
        %v1480 = vunpack.c.h.b16 %v1201
        %v1481 = vunpack.c.l.b16 %v1202
        %v1482 = vunpack.c.h.b16 %v1202
        %v1483 = vunpack.c.l.b16 %v1203
        %v1484 = vunpack.c.h.b16 %v1203
        %v1485 = vunpack.c.l.b16 %v1204
        %v1486 = vunpack.c.h.b16 %v1204
        %v1487 = vunpack.c.l.b16 %v1205
        %v1488 = vunpack.c.h.b16 %v1205
        %v1489 = vunpack.c.l.b16 %v1206
        %v1490 = vunpack.c.h.b16 %v1206
        %v1491 = vunpack.c.l.b16 %v1207
        %v1492 = vunpack.c.h.b16 %v1207
        %v1493 = vunpack.c.l.b16 %v1208
        %v1494 = vunpack.c.h.b16 %v1208
        %v1495 = vunpack.c.l.b16 %v1209
        %v1496 = vunpack.c.h.b16 %v1209
        %v1497 = vunpack.c.l.b16 %v1210
        %v1498 = vunpack.c.h.b16 %v1210
        %v1499 = vpack.c.b16 %v1437, %v1435
        %v1500 = vpack.c.b16 %v1438, %v1436
        %v1501 = vpack.c.b16 %v1441, %v1439
        %v1502 = vpack.c.b16 %v1442, %v1440
        %v1503 = vpack.c.b16 %v1445, %v1443
        %v1504 = vpack.c.b16 %v1446, %v1444
        %v1505 = vpack.c.b16 %v1449, %v1447
        %v1506 = vpack.c.b16 %v1450, %v1448
        %v1507 = vpack.c.b16 %v1453, %v1451
        %v1508 = vpack.c.b16 %v1454, %v1452
        %v1509 = vpack.c.b16 %v1457, %v1455
        %v1510 = vpack.c.b16 %v1458, %v1456
        %v1511 = vpack.c.b16 %v1461, %v1459
        %v1512 = vpack.c.b16 %v1462, %v1460
        %v1513 = vpack.c.b16 %v1465, %v1463
        %v1514 = vpack.c.b16 %v1466, %v1464
        %v1515 = vpack.c.b16 %v1469, %v1467
        %v1516 = vpack.c.b16 %v1470, %v1468
        %v1517 = vpack.c.b16 %v1473, %v1471
        %v1518 = vpack.c.b16 %v1474, %v1472
        %v1519 = vpack.c.b16 %v1477, %v1475
        %v1520 = vpack.c.b16 %v1478, %v1476
        %v1521 = vpack.c.b16 %v1481, %v1479
        %v1522 = vpack.c.b16 %v1482, %v1480
        %v1523 = vpack.c.b16 %v1485, %v1483
        %v1524 = vpack.c.b16 %v1486, %v1484
        %v1525 = vpack.c.b16 %v1489, %v1487
        %v1526 = vpack.c.b16 %v1490, %v1488
        %v1527 = vpack.c.b16 %v1493, %v1491
        %v1528 = vpack.c.b16 %v1494, %v1492
        %v1529 = vpack.c.b16 %v1497, %v1495
        %v1530 = vpack.c.b16 %v1498, %v1496
        %1563 = vmatprep.subr.bf16.mxu0 %v1212
        %1564 = vmatpush1.bf16.msra.mxu0 %v1211
        %1565 = vmatprep.subr.bf16.mxu0 %v1216
        %1566 = vmatpush1.bf16.msra.mxu0 %v1215
        %1567 = vmatprep.subr.bf16.mxu0 %v1220
        %1568 = vmatpush1.bf16.msra.mxu0 %v1219
        %1569 = vmatprep.subr.bf16.mxu0 %v1224
        %1570 = vmatpush1.bf16.msra.mxu0 %v1223
        %1571 = vmatprep.subr.bf16.mxu0 %v1228
        %1572 = vmatpush1.bf16.msra.mxu0 %v1227
        %1573 = vmatprep.subr.bf16.mxu0 %v1232
        %1574 = vmatpush1.bf16.msra.mxu0 %v1231
        %1575 = vmatprep.subr.bf16.mxu0 %v1236
        %1576 = vmatpush1.bf16.msra.mxu0 %v1235
        %1577 = vmatprep.subr.bf16.mxu0 %v1240
        %1578 = vmatpush1.bf16.msra.mxu0 %v1239
        %1579 = vmatprep.subr.bf16.mxu0 %v1244
        %1580 = vmatpush1.bf16.msra.mxu0 %v1243
        %1581 = vmatprep.subr.bf16.mxu0 %v1248
        %1582 = vmatpush1.bf16.msra.mxu0 %v1247
        %1583 = vmatprep.subr.bf16.mxu0 %v1252
        %1584 = vmatpush1.bf16.msra.mxu0 %v1251
        %1585 = vmatprep.subr.bf16.mxu0 %v1256
        %1586 = vmatpush1.bf16.msra.mxu0 %v1255
        %1587 = vmatprep.subr.bf16.mxu0 %v1260
        %1588 = vmatpush1.bf16.msra.mxu0 %v1259
        %1589 = vmatprep.subr.bf16.mxu0 %v1264
        %1590 = vmatpush1.bf16.msra.mxu0 %v1263
        %1591 = vmatprep.subr.bf16.mxu0 %v1268
        %1592 = vmatpush1.bf16.msra.mxu0 %v1267
        %1593 = vmatprep.subr.bf16.mxu0 %v1272
        %1594 = vmatpush1.bf16.msra.mxu0 %v1271
        %1595 = vmatprep.mubr.bf16.mxu0 %v1500
        %1596 = vmatmul.mubr.bf16.gmra.mrb[0].mxu0 %v1499
        %v1597 = vpop.f32.mrb[0].mxu0
        %v1598 = vadd.f32 %v1277, %v1597
        %v1599 = vpop.f32.mrb[0].mxu0
        %v1600 = vadd.f32 %v1277, %v1599
        %v1601 = vpop.f32.mrb[0].mxu0
        %v1602 = vadd.f32 %v1281, %v1601
        %v1603 = vpop.f32.mrb[0].mxu0
        %v1604 = vadd.f32 %v1281, %v1603
        %1605 = vmatprep.mubr.bf16.mxu0 %v1502
        %1606 = vmatmul.mubr.bf16.gmra.mrb[0].mxu0 %v1501
        %v1607 = vpop.f32.mrb[0].mxu0
        %v1608 = vadd.f32 %v1285, %v1607
        %v1609 = vpop.f32.mrb[0].mxu0
        %v1610 = vadd.f32 %v1285, %v1609
        %v1611 = vpop.f32.mrb[0].mxu0
        %v1612 = vadd.f32 %v1289, %v1611
        %v1613 = vpop.f32.mrb[0].mxu0
        %v1614 = vadd.f32 %v1289, %v1613
        %1615 = vmatprep.mubr.bf16.mxu0 %v1504
        %1616 = vmatmul.mubr.bf16.gmra.mrb[0].mxu0 %v1503
        %v1617 = vpop.f32.mrb[0].mxu0
        %v1618 = vadd.f32 %v1293, %v1617
        %v1619 = vpop.f32.mrb[0].mxu0
        %v1620 = vadd.f32 %v1293, %v1619
        %v1621 = vpop.f32.mrb[0].mxu0
        %v1622 = vadd.f32 %v1297, %v1621
        %v1623 = vpop.f32.mrb[0].mxu0
        %v1624 = vadd.f32 %v1297, %v1623
        %1625 = vmatprep.mubr.bf16.mxu0 %v1506
        %1626 = vmatmul.mubr.bf16.gmra.mrb[0].mxu0 %v1505
        %v1627 = vpop.f32.mrb[0].mxu0
        %v1628 = vadd.f32 %v1301, %v1627
        %v1629 = vpop.f32.mrb[0].mxu0
        %v1630 = vadd.f32 %v1301, %v1629
        %v1631 = vpop.f32.mrb[0].mxu0
        %v1632 = vadd.f32 %v1305, %v1631
        %v1633 = vpop.f32.mrb[0].mxu0
        %v1634 = vadd.f32 %v1305, %v1633
        %1635 = vmatprep.mubr.bf16.mxu0 %v1508
        %1636 = vmatmul.mubr.bf16.gmra.mrb[0].mxu0 %v1507
        %v1637 = vpop.f32.mrb[0].mxu0
        %v1638 = vadd.f32 %v1309, %v1637
        %v1639 = vpop.f32.mrb[0].mxu0
        %v1640 = vadd.f32 %v1309, %v1639
        %v1641 = vpop.f32.mrb[0].mxu0
        %v1642 = vadd.f32 %v1313, %v1641
        %v1643 = vpop.f32.mrb[0].mxu0
        %v1644 = vadd.f32 %v1313, %v1643
        %1645 = vmatprep.mubr.bf16.mxu0 %v1510
        %1646 = vmatmul.mubr.bf16.gmra.mrb[0].mxu0 %v1509
        %v1647 = vpop.f32.mrb[0].mxu0
        %v1648 = vadd.f32 %v1317, %v1647
        %v1649 = vpop.f32.mrb[0].mxu0
        %v1650 = vadd.f32 %v1317, %v1649
        %v1651 = vpop.f32.mrb[0].mxu0
        %v1652 = vadd.f32 %v1321, %v1651
        %v1653 = vpop.f32.mrb[0].mxu0
        %v1654 = vadd.f32 %v1321, %v1653
        %1655 = vmatprep.mubr.bf16.mxu0 %v1512
        %1656 = vmatmul.mubr.bf16.gmra.mrb[0].mxu0 %v1511
        %v1657 = vpop.f32.mrb[0].mxu0
        %v1658 = vadd.f32 %v1325, %v1657
        %v1659 = vpop.f32.mrb[0].mxu0
        %v1660 = vadd.f32 %v1325, %v1659
        %v1661 = vpop.f32.mrb[0].mxu0
        %v1662 = vadd.f32 %v1329, %v1661
        %v1663 = vpop.f32.mrb[0].mxu0
        %v1664 = vadd.f32 %v1329, %v1663
        %1665 = vmatprep.mubr.bf16.mxu0 %v1514
        %1666 = vmatmul.mubr.bf16.gmra.mrb[0].mxu0 %v1513
        %v1667 = vpop.f32.mrb[0].mxu0
        %v1668 = vadd.f32 %v1333, %v1667
        %v1669 = vpop.f32.mrb[0].mxu0
        %v1670 = vadd.f32 %v1333, %v1669
        %v1671 = vpop.f32.mrb[0].mxu0
        %v1672 = vadd.f32 %v1337, %v1671
        %v1673 = vpop.f32.mrb[0].mxu0
        %v1674 = vadd.f32 %v1337, %v1673
        %1675 = vmatprep.mubr.bf16.mxu0 %v1516
        %1676 = vmatmul.mubr.bf16.gmra.mrb[0].mxu0 %v1515
        %v1677 = vpop.f32.mrb[0].mxu0
        %v1678 = vadd.f32 %v1341, %v1677
        %v1679 = vpop.f32.mrb[0].mxu0
        %v1680 = vadd.f32 %v1341, %v1679
        %v1681 = vpop.f32.mrb[0].mxu0
        %v1682 = vadd.f32 %v1345, %v1681
        %v1683 = vpop.f32.mrb[0].mxu0
        %v1684 = vadd.f32 %v1345, %v1683
        %1685 = vmatprep.mubr.bf16.mxu0 %v1518
        %1686 = vmatmul.mubr.bf16.gmra.mrb[0].mxu0 %v1517
        %v1687 = vpop.f32.mrb[0].mxu0
        %v1688 = vadd.f32 %v1349, %v1687
        %v1689 = vpop.f32.mrb[0].mxu0
        %v1690 = vadd.f32 %v1349, %v1689
        %v1691 = vpop.f32.mrb[0].mxu0
        %v1692 = vadd.f32 %v1353, %v1691
        %v1693 = vpop.f32.mrb[0].mxu0
        %v1694 = vadd.f32 %v1353, %v1693
        %1695 = vmatprep.mubr.bf16.mxu0 %v1520
        %1696 = vmatmul.mubr.bf16.gmra.mrb[0].mxu0 %v1519
        %v1697 = vpop.f32.mrb[0].mxu0
        %v1698 = vadd.f32 %v1357, %v1697
        %v1699 = vpop.f32.mrb[0].mxu0
        %v1700 = vadd.f32 %v1357, %v1699
        %v1701 = vpop.f32.mrb[0].mxu0
        %v1702 = vadd.f32 %v1361, %v1701
        %v1703 = vpop.f32.mrb[0].mxu0
        %v1704 = vadd.f32 %v1361, %v1703
        %1705 = vmatprep.mubr.bf16.mxu0 %v1522
        %1706 = vmatmul.mubr.bf16.gmra.mrb[0].mxu0 %v1521
        %v1707 = vpop.f32.mrb[0].mxu0
        %v1708 = vadd.f32 %v1365, %v1707
        %v1709 = vpop.f32.mrb[0].mxu0
        %v1710 = vadd.f32 %v1365, %v1709
        %v1711 = vpop.f32.mrb[0].mxu0
        %v1712 = vadd.f32 %v1369, %v1711
        %v1713 = vpop.f32.mrb[0].mxu0
        %v1714 = vadd.f32 %v1369, %v1713
        %1715 = vmatprep.mubr.bf16.mxu0 %v1524
        %1716 = vmatmul.mubr.bf16.gmra.mrb[0].mxu0 %v1523
        %v1717 = vpop.f32.mrb[0].mxu0
        %v1718 = vadd.f32 %v1373, %v1717
        %v1719 = vpop.f32.mrb[0].mxu0
        %v1720 = vadd.f32 %v1373, %v1719
        %v1721 = vpop.f32.mrb[0].mxu0
        %v1722 = vadd.f32 %v1377, %v1721
        %v1723 = vpop.f32.mrb[0].mxu0
        %v1724 = vadd.f32 %v1377, %v1723
        %1725 = vmatprep.mubr.bf16.mxu0 %v1526
        %1726 = vmatmul.mubr.bf16.gmra.mrb[0].mxu0 %v1525
        %v1727 = vpop.f32.mrb[0].mxu0
        %v1728 = vadd.f32 %v1381, %v1727
        %v1729 = vpop.f32.mrb[0].mxu0
        %v1730 = vadd.f32 %v1381, %v1729
        %v1731 = vpop.f32.mrb[0].mxu0
        %v1732 = vadd.f32 %v1385, %v1731
        %v1733 = vpop.f32.mrb[0].mxu0
        %v1734 = vadd.f32 %v1385, %v1733
        %1735 = vmatprep.mubr.bf16.mxu0 %v1528
        %1736 = vmatmul.mubr.bf16.gmra.mrb[0].mxu0 %v1527
        %v1737 = vpop.f32.mrb[0].mxu0
        %v1738 = vadd.f32 %v1389, %v1737
        %v1739 = vpop.f32.mrb[0].mxu0
        %v1740 = vadd.f32 %v1389, %v1739
        %v1741 = vpop.f32.mrb[0].mxu0
        %v1742 = vadd.f32 %v1393, %v1741
        %v1743 = vpop.f32.mrb[0].mxu0
        %v1744 = vadd.f32 %v1393, %v1743
        %1745 = vmatprep.mubr.bf16.mxu0 %v1530
        %1746 = vmatmul.mubr.bf16.gmra.mrb[0].mxu0 %v1529
        %v1747 = vpop.f32.mrb[0].mxu0
        %v1748 = vadd.f32 %v1397, %v1747
        %v1749 = vpop.f32.mrb[0].mxu0
        %v1750 = vadd.f32 %v1397, %v1749
        %v1751 = vpop.f32.mrb[0].mxu0
        %v1752 = vadd.f32 %v1401, %v1751
        %v1753 = vpop.f32.mrb[0].mxu0
        %v1754 = vadd.f32 %v1401, %v1753
        %1755 = vdwg.mxu0
        %1756 = vmatprep.subr.bf16.mxu0 %v1214
        %1757 = vmatpush1.bf16.msra.mxu0 %v1213
        %1758 = vmatprep.subr.bf16.mxu0 %v1218
        %1759 = vmatpush1.bf16.msra.mxu0 %v1217
        %1760 = vmatprep.subr.bf16.mxu0 %v1222
        %1761 = vmatpush1.bf16.msra.mxu0 %v1221
        %1762 = vmatprep.subr.bf16.mxu0 %v1226
        %1763 = vmatpush1.bf16.msra.mxu0 %v1225
        %1764 = vmatprep.subr.bf16.mxu0 %v1230
        %1765 = vmatpush1.bf16.msra.mxu0 %v1229
        %1766 = vmatprep.subr.bf16.mxu0 %v1234
        %1767 = vmatpush1.bf16.msra.mxu0 %v1233
        %1768 = vmatprep.subr.bf16.mxu0 %v1238
        %1769 = vmatpush1.bf16.msra.mxu0 %v1237
        %1770 = vmatprep.subr.bf16.mxu0 %v1242
        %1771 = vmatpush1.bf16.msra.mxu0 %v1241
        %1772 = vmatprep.subr.bf16.mxu0 %v1246
        %1773 = vmatpush1.bf16.msra.mxu0 %v1245
        %1774 = vmatprep.subr.bf16.mxu0 %v1250
        %1775 = vmatpush1.bf16.msra.mxu0 %v1249
        %1776 = vmatprep.subr.bf16.mxu0 %v1254
        %1777 = vmatpush1.bf16.msra.mxu0 %v1253
        %1778 = vmatprep.subr.bf16.mxu0 %v1258
        %1779 = vmatpush1.bf16.msra.mxu0 %v1257
        %1780 = vmatprep.subr.bf16.mxu0 %v1262
        %1781 = vmatpush1.bf16.msra.mxu0 %v1261
        %1782 = vmatprep.subr.bf16.mxu0 %v1266
        %1783 = vmatpush1.bf16.msra.mxu0 %v1265
        %1784 = vmatprep.subr.bf16.mxu0 %v1270
        %1785 = vmatpush1.bf16.msra.mxu0 %v1269
        %1786 = vmatprep.subr.bf16.mxu0 %v1274
        %1787 = vmatpush1.bf16.msra.mxu0 %v1273
        %1788 = vmatprep.mubr.bf16.mxu0 %v1500
        %1789 = vmatmul.mubr.bf16.gmra.mrb[0].mxu0 %v1499
        %v1790 = vpop.f32.mrb[0].mxu0
        %v1791 = vadd.f32 %v1277, %v1790
        %v1792 = vpop.f32.mrb[0].mxu0
        %v1793 = vadd.f32 %v1277, %v1792
        %v1794 = vpop.f32.mrb[0].mxu0
        %v1795 = vadd.f32 %v1281, %v1794
        %v1796 = vpop.f32.mrb[0].mxu0
        %v1797 = vadd.f32 %v1281, %v1796
        %1798 = vmatprep.mubr.bf16.mxu0 %v1502
        %1799 = vmatmul.mubr.bf16.gmra.mrb[0].mxu0 %v1501
        %v1800 = vpop.f32.mrb[0].mxu0
        %v1801 = vadd.f32 %v1285, %v1800
        %v1802 = vpop.f32.mrb[0].mxu0
        %v1803 = vadd.f32 %v1285, %v1802
        %v1804 = vpop.f32.mrb[0].mxu0
        %v1805 = vadd.f32 %v1289, %v1804
        %v1806 = vpop.f32.mrb[0].mxu0
        %v1807 = vadd.f32 %v1289, %v1806
        %1808 = vmatprep.mubr.bf16.mxu0 %v1504
        %1809 = vmatmul.mubr.bf16.gmra.mrb[0].mxu0 %v1503
        %v1810 = vpop.f32.mrb[0].mxu0
        %v1811 = vadd.f32 %v1293, %v1810
        %v1812 = vpop.f32.mrb[0].mxu0
        %v1813 = vadd.f32 %v1293, %v1812
        %v1814 = vpop.f32.mrb[0].mxu0
        %v1815 = vadd.f32 %v1297, %v1814
        %v1816 = vpop.f32.mrb[0].mxu0
        %v1817 = vadd.f32 %v1297, %v1816
        %1818 = vmatprep.mubr.bf16.mxu0 %v1506
        %1819 = vmatmul.mubr.bf16.gmra.mrb[0].mxu0 %v1505
        %v1820 = vpop.f32.mrb[0].mxu0
        %v1821 = vadd.f32 %v1301, %v1820
        %v1822 = vpop.f32.mrb[0].mxu0
        %v1823 = vadd.f32 %v1301, %v1822
        %v1824 = vpop.f32.mrb[0].mxu0
        %v1825 = vadd.f32 %v1305, %v1824
        %v1826 = vpop.f32.mrb[0].mxu0
        %v1827 = vadd.f32 %v1305, %v1826
        %1828 = vmatprep.mubr.bf16.mxu0 %v1508
        %1829 = vmatmul.mubr.bf16.gmra.mrb[0].mxu0 %v1507
        %v1830 = vpop.f32.mrb[0].mxu0
        %v1831 = vadd.f32 %v1309, %v1830
        %v1832 = vpop.f32.mrb[0].mxu0
        %v1833 = vadd.f32 %v1309, %v1832
        %v1834 = vpop.f32.mrb[0].mxu0
        %v1835 = vadd.f32 %v1313, %v1834
        %v1836 = vpop.f32.mrb[0].mxu0
        %v1837 = vadd.f32 %v1313, %v1836
        %1838 = vmatprep.mubr.bf16.mxu0 %v1510
        %1839 = vmatmul.mubr.bf16.gmra.mrb[0].mxu0 %v1509
        %v1840 = vpop.f32.mrb[0].mxu0
        %v1841 = vadd.f32 %v1317, %v1840
        %v1842 = vpop.f32.mrb[0].mxu0
        %v1843 = vadd.f32 %v1317, %v1842
        %v1844 = vpop.f32.mrb[0].mxu0
        %v1845 = vadd.f32 %v1321, %v1844
        %v1846 = vpop.f32.mrb[0].mxu0
        %v1847 = vadd.f32 %v1321, %v1846
        %1848 = vmatprep.mubr.bf16.mxu0 %v1512
        %1849 = vmatmul.mubr.bf16.gmra.mrb[0].mxu0 %v1511
        %v1850 = vpop.f32.mrb[0].mxu0
        %v1851 = vadd.f32 %v1325, %v1850
        %v1852 = vpop.f32.mrb[0].mxu0
        %v1853 = vadd.f32 %v1325, %v1852
        %v1854 = vpop.f32.mrb[0].mxu0
        %v1855 = vadd.f32 %v1329, %v1854
        %v1856 = vpop.f32.mrb[0].mxu0
        %v1857 = vadd.f32 %v1329, %v1856
        %1858 = vmatprep.mubr.bf16.mxu0 %v1514
        %1859 = vmatmul.mubr.bf16.gmra.mrb[0].mxu0 %v1513
        %v1860 = vpop.f32.mrb[0].mxu0
        %v1861 = vadd.f32 %v1333, %v1860
        %v1862 = vpop.f32.mrb[0].mxu0
        %v1863 = vadd.f32 %v1333, %v1862
        %v1864 = vpop.f32.mrb[0].mxu0
        %v1865 = vadd.f32 %v1337, %v1864
        %v1866 = vpop.f32.mrb[0].mxu0
        %v1867 = vadd.f32 %v1337, %v1866
        %1868 = vmatprep.mubr.bf16.mxu0 %v1516
        %1869 = vmatmul.mubr.bf16.gmra.mrb[0].mxu0 %v1515
        %v1870 = vpop.f32.mrb[0].mxu0
        %v1871 = vadd.f32 %v1341, %v1870
        %v1872 = vpop.f32.mrb[0].mxu0
        %v1873 = vadd.f32 %v1341, %v1872
        %v1874 = vpop.f32.mrb[0].mxu0
        %v1875 = vadd.f32 %v1345, %v1874
        %v1876 = vpop.f32.mrb[0].mxu0
        %v1877 = vadd.f32 %v1345, %v1876
        %1878 = vmatprep.mubr.bf16.mxu0 %v1518
        %1879 = vmatmul.mubr.bf16.gmra.mrb[0].mxu0 %v1517
        %v1880 = vpop.f32.mrb[0].mxu0
        %v1881 = vadd.f32 %v1349, %v1880
        %v1882 = vpop.f32.mrb[0].mxu0
        %v1883 = vadd.f32 %v1349, %v1882
        %v1884 = vpop.f32.mrb[0].mxu0
        %v1885 = vadd.f32 %v1353, %v1884
        %v1886 = vpop.f32.mrb[0].mxu0
        %v1887 = vadd.f32 %v1353, %v1886
        %1888 = vmatprep.mubr.bf16.mxu0 %v1520
        %1889 = vmatmul.mubr.bf16.gmra.mrb[0].mxu0 %v1519
        %v1890 = vpop.f32.mrb[0].mxu0
        %v1891 = vadd.f32 %v1357, %v1890
        %v1892 = vpop.f32.mrb[0].mxu0
        %v1893 = vadd.f32 %v1357, %v1892
        %v1894 = vpop.f32.mrb[0].mxu0
        %v1895 = vadd.f32 %v1361, %v1894
        %v1896 = vpop.f32.mrb[0].mxu0
        %v1897 = vadd.f32 %v1361, %v1896
        %1898 = vmatprep.mubr.bf16.mxu0 %v1522
        %1899 = vmatmul.mubr.bf16.gmra.mrb[0].mxu0 %v1521
        %v1900 = vpop.f32.mrb[0].mxu0
        %v1901 = vadd.f32 %v1365, %v1900
        %v1902 = vpop.f32.mrb[0].mxu0
        %v1903 = vadd.f32 %v1365, %v1902
        %v1904 = vpop.f32.mrb[0].mxu0
        %v1905 = vadd.f32 %v1369, %v1904
        %v1906 = vpop.f32.mrb[0].mxu0
        %v1907 = vadd.f32 %v1369, %v1906
        %1908 = vmatprep.mubr.bf16.mxu0 %v1524
        %1909 = vmatmul.mubr.bf16.gmra.mrb[0].mxu0 %v1523
        %v1910 = vpop.f32.mrb[0].mxu0
        %v1911 = vadd.f32 %v1373, %v1910
        %v1912 = vpop.f32.mrb[0].mxu0
        %v1913 = vadd.f32 %v1373, %v1912
        %v1914 = vpop.f32.mrb[0].mxu0
        %v1915 = vadd.f32 %v1377, %v1914
        %v1916 = vpop.f32.mrb[0].mxu0
        %v1917 = vadd.f32 %v1377, %v1916
        %1918 = vmatprep.mubr.bf16.mxu0 %v1526
        %1919 = vmatmul.mubr.bf16.gmra.mrb[0].mxu0 %v1525
        %v1920 = vpop.f32.mrb[0].mxu0
        %v1921 = vadd.f32 %v1381, %v1920
        %v1922 = vpop.f32.mrb[0].mxu0
        %v1923 = vadd.f32 %v1381, %v1922
        %v1924 = vpop.f32.mrb[0].mxu0
        %v1925 = vadd.f32 %v1385, %v1924
        %v1926 = vpop.f32.mrb[0].mxu0
        %v1927 = vadd.f32 %v1385, %v1926
        %1928 = vmatprep.mubr.bf16.mxu0 %v1528
        %1929 = vmatmul.mubr.bf16.gmra.mrb[0].mxu0 %v1527
        %v1930 = vpop.f32.mrb[0].mxu0
        %v1931 = vadd.f32 %v1389, %v1930
        %v1932 = vpop.f32.mrb[0].mxu0
        %v1933 = vadd.f32 %v1389, %v1932
        %v1934 = vpop.f32.mrb[0].mxu0
        %v1935 = vadd.f32 %v1393, %v1934
        %v1936 = vpop.f32.mrb[0].mxu0
        %v1937 = vadd.f32 %v1393, %v1936
        %1938 = vmatprep.mubr.bf16.mxu0 %v1530
        %1939 = vmatmul.mubr.bf16.gmra.mrb[0].mxu0 %v1529
        %v1940 = vpop.f32.mrb[0].mxu0
        %v1941 = vadd.f32 %v1397, %v1940
        %v1942 = vpop.f32.mrb[0].mxu0
        %v1943 = vadd.f32 %v1397, %v1942
        %v1944 = vpop.f32.mrb[0].mxu0
        %v1945 = vadd.f32 %v1401, %v1944
        %v1946 = vpop.f32.mrb[0].mxu0
        %v1947 = vadd.f32 %v1401, %v1946
        %1948 = vdwg.mxu0
        %vm1949 = vcmp.gt.f32.partialorder %v1598, 0.0
        %vm1950 = vcmp.gt.f32.partialorder %v1600, 0.0
        %vm1951 = vcmp.gt.f32.partialorder %v1791, 0.0
        %vm1952 = vcmp.gt.f32.partialorder %v1793, 0.0
        %vm1953 = vcmp.gt.f32.partialorder %v1602, 0.0
        %vm1954 = vcmp.gt.f32.partialorder %v1604, 0.0
        %vm1955 = vcmp.gt.f32.partialorder %v1795, 0.0
        %vm1956 = vcmp.gt.f32.partialorder %v1797, 0.0
        %vm1957 = vcmp.gt.f32.partialorder %v1608, 0.0
        %vm1958 = vcmp.gt.f32.partialorder %v1610, 0.0
        %vm1959 = vcmp.gt.f32.partialorder %v1801, 0.0
        %vm1960 = vcmp.gt.f32.partialorder %v1803, 0.0
        %vm1961 = vcmp.gt.f32.partialorder %v1612, 0.0
        %vm1962 = vcmp.gt.f32.partialorder %v1614, 0.0
        %vm1963 = vcmp.gt.f32.partialorder %v1805, 0.0
        %vm1964 = vcmp.gt.f32.partialorder %v1807, 0.0
        %vm1965 = vcmp.gt.f32.partialorder %v1618, 0.0
        %vm1966 = vcmp.gt.f32.partialorder %v1620, 0.0
        %vm1967 = vcmp.gt.f32.partialorder %v1811, 0.0
        %vm1968 = vcmp.gt.f32.partialorder %v1813, 0.0
        %vm1969 = vcmp.gt.f32.partialorder %v1622, 0.0
        %vm1970 = vcmp.gt.f32.partialorder %v1624, 0.0
        %vm1971 = vcmp.gt.f32.partialorder %v1815, 0.0
        %vm1972 = vcmp.gt.f32.partialorder %v1817, 0.0
        %vm1973 = vcmp.gt.f32.partialorder %v1628, 0.0
        %vm1974 = vcmp.gt.f32.partialorder %v1630, 0.0
        %vm1975 = vcmp.gt.f32.partialorder %v1821, 0.0
        %vm1976 = vcmp.gt.f32.partialorder %v1823, 0.0
        %vm1977 = vcmp.gt.f32.partialorder %v1632, 0.0
        %vm1978 = vcmp.gt.f32.partialorder %v1634, 0.0
        %vm1979 = vcmp.gt.f32.partialorder %v1825, 0.0
        %vm1980 = vcmp.gt.f32.partialorder %v1827, 0.0
        %vm1981 = vcmp.gt.f32.partialorder %v1638, 0.0
        %vm1982 = vcmp.gt.f32.partialorder %v1640, 0.0
        %vm1983 = vcmp.gt.f32.partialorder %v1831, 0.0
        %vm1984 = vcmp.gt.f32.partialorder %v1833, 0.0
        %vm1985 = vcmp.gt.f32.partialorder %v1642, 0.0
        %vm1986 = vcmp.gt.f32.partialorder %v1644, 0.0
        %vm1987 = vcmp.gt.f32.partialorder %v1835, 0.0
        %vm1988 = vcmp.gt.f32.partialorder %v1837, 0.0
        %vm1989 = vcmp.gt.f32.partialorder %v1648, 0.0
        %vm1990 = vcmp.gt.f32.partialorder %v1650, 0.0
        %vm1991 = vcmp.gt.f32.partialorder %v1841, 0.0
        %vm1992 = vcmp.gt.f32.partialorder %v1843, 0.0
        %vm1993 = vcmp.gt.f32.partialorder %v1652, 0.0
        %vm1994 = vcmp.gt.f32.partialorder %v1654, 0.0
        %vm1995 = vcmp.gt.f32.partialorder %v1845, 0.0
        %vm1996 = vcmp.gt.f32.partialorder %v1847, 0.0
        %vm1997 = vcmp.gt.f32.partialorder %v1658, 0.0
        %vm1998 = vcmp.gt.f32.partialorder %v1660, 0.0
        %vm1999 = vcmp.gt.f32.partialorder %v1851, 0.0
        %vm2000 = vcmp.gt.f32.partialorder %v1853, 0.0
        %vm2001 = vcmp.gt.f32.partialorder %v1662, 0.0
        %vm2002 = vcmp.gt.f32.partialorder %v1664, 0.0
        %vm2003 = vcmp.gt.f32.partialorder %v1855, 0.0
        %vm2004 = vcmp.gt.f32.partialorder %v1857, 0.0
        %vm2005 = vcmp.gt.f32.partialorder %v1668, 0.0
        %vm2006 = vcmp.gt.f32.partialorder %v1670, 0.0
        %vm2007 = vcmp.gt.f32.partialorder %v1861, 0.0
        %vm2008 = vcmp.gt.f32.partialorder %v1863, 0.0
        %vm2009 = vcmp.gt.f32.partialorder %v1672, 0.0
        %vm2010 = vcmp.gt.f32.partialorder %v1674, 0.0
        %vm2011 = vcmp.gt.f32.partialorder %v1865, 0.0
        %vm2012 = vcmp.gt.f32.partialorder %v1867, 0.0
        %vm2013 = vcmp.gt.f32.partialorder %v1678, 0.0
        %vm2014 = vcmp.gt.f32.partialorder %v1680, 0.0
        %vm2015 = vcmp.gt.f32.partialorder %v1871, 0.0
        %vm2016 = vcmp.gt.f32.partialorder %v1873, 0.0
        %vm2017 = vcmp.gt.f32.partialorder %v1682, 0.0
        %vm2018 = vcmp.gt.f32.partialorder %v1684, 0.0
        %vm2019 = vcmp.gt.f32.partialorder %v1875, 0.0
        %vm2020 = vcmp.gt.f32.partialorder %v1877, 0.0
        %vm2021 = vcmp.gt.f32.partialorder %v1688, 0.0
        %vm2022 = vcmp.gt.f32.partialorder %v1690, 0.0
        %vm2023 = vcmp.gt.f32.partialorder %v1881, 0.0
        %vm2024 = vcmp.gt.f32.partialorder %v1883, 0.0
        %vm2025 = vcmp.gt.f32.partialorder %v1692, 0.0
        %vm2026 = vcmp.gt.f32.partialorder %v1694, 0.0
        %vm2027 = vcmp.gt.f32.partialorder %v1885, 0.0
        %vm2028 = vcmp.gt.f32.partialorder %v1887, 0.0
        %vm2029 = vcmp.gt.f32.partialorder %v1698, 0.0
        %vm2030 = vcmp.gt.f32.partialorder %v1700, 0.0
        %vm2031 = vcmp.gt.f32.partialorder %v1891, 0.0
        %vm2032 = vcmp.gt.f32.partialorder %v1893, 0.0
        %vm2033 = vcmp.gt.f32.partialorder %v1702, 0.0
        %vm2034 = vcmp.gt.f32.partialorder %v1704, 0.0
        %vm2035 = vcmp.gt.f32.partialorder %v1895, 0.0
        %vm2036 = vcmp.gt.f32.partialorder %v1897, 0.0
        %vm2037 = vcmp.gt.f32.partialorder %v1708, 0.0
        %vm2038 = vcmp.gt.f32.partialorder %v1710, 0.0
        %vm2039 = vcmp.gt.f32.partialorder %v1901, 0.0
        %vm2040 = vcmp.gt.f32.partialorder %v1903, 0.0
        %vm2041 = vcmp.gt.f32.partialorder %v1712, 0.0
        %vm2042 = vcmp.gt.f32.partialorder %v1714, 0.0
        %vm2043 = vcmp.gt.f32.partialorder %v1905, 0.0
        %vm2044 = vcmp.gt.f32.partialorder %v1907, 0.0
        %vm2045 = vcmp.gt.f32.partialorder %v1718, 0.0
        %vm2046 = vcmp.gt.f32.partialorder %v1720, 0.0
        %vm2047 = vcmp.gt.f32.partialorder %v1911, 0.0
        %vm2048 = vcmp.gt.f32.partialorder %v1913, 0.0
        %vm2049 = vcmp.gt.f32.partialorder %v1722, 0.0
        %vm2050 = vcmp.gt.f32.partialorder %v1724, 0.0
        %vm2051 = vcmp.gt.f32.partialorder %v1915, 0.0
        %vm2052 = vcmp.gt.f32.partialorder %v1917, 0.0
        %vm2053 = vcmp.gt.f32.partialorder %v1728, 0.0
        %vm2054 = vcmp.gt.f32.partialorder %v1730, 0.0
        %vm2055 = vcmp.gt.f32.partialorder %v1921, 0.0
        %vm2056 = vcmp.gt.f32.partialorder %v1923, 0.0
        %vm2057 = vcmp.gt.f32.partialorder %v1732, 0.0
        %vm2058 = vcmp.gt.f32.partialorder %v1734, 0.0
        %vm2059 = vcmp.gt.f32.partialorder %v1925, 0.0
        %vm2060 = vcmp.gt.f32.partialorder %v1927, 0.0
        %vm2061 = vcmp.gt.f32.partialorder %v1738, 0.0
        %vm2062 = vcmp.gt.f32.partialorder %v1740, 0.0
        %vm2063 = vcmp.gt.f32.partialorder %v1931, 0.0
        %vm2064 = vcmp.gt.f32.partialorder %v1933, 0.0
        %vm2065 = vcmp.gt.f32.partialorder %v1742, 0.0
        %vm2066 = vcmp.gt.f32.partialorder %v1744, 0.0
        %vm2067 = vcmp.gt.f32.partialorder %v1935, 0.0
        %vm2068 = vcmp.gt.f32.partialorder %v1937, 0.0
        %vm2069 = vcmp.gt.f32.partialorder %v1748, 0.0
        %vm2070 = vcmp.gt.f32.partialorder %v1750, 0.0
        %vm2071 = vcmp.gt.f32.partialorder %v1941, 0.0
        %vm2072 = vcmp.gt.f32.partialorder %v1943, 0.0
        %vm2073 = vcmp.gt.f32.partialorder %v1752, 0.0
        %vm2074 = vcmp.gt.f32.partialorder %v1754, 0.0
        %vm2075 = vcmp.gt.f32.partialorder %v1945, 0.0
        %vm2076 = vcmp.gt.f32.partialorder %v1947, 0.0
        %v2077 = vmul.f32 %v1598, 0.01
        %v2078 = vmul.f32 %v1600, 0.01
        %v2079 = vmul.f32 %v1791, 0.01
        %v2080 = vmul.f32 %v1793, 0.01
        %v2081 = vmul.f32 %v1602, 0.01
        %v2082 = vmul.f32 %v1604, 0.01
        %v2083 = vmul.f32 %v1795, 0.01
        %v2084 = vmul.f32 %v1797, 0.01
        %v2085 = vmul.f32 %v1608, 0.01
        %v2086 = vmul.f32 %v1610, 0.01
        %v2087 = vmul.f32 %v1801, 0.01
        %v2088 = vmul.f32 %v1803, 0.01
        %v2089 = vmul.f32 %v1612, 0.01
        %v2090 = vmul.f32 %v1614, 0.01
        %v2091 = vmul.f32 %v1805, 0.01
        %v2092 = vmul.f32 %v1807, 0.01
        %v2093 = vmul.f32 %v1618, 0.01
        %v2094 = vmul.f32 %v1620, 0.01
        %v2095 = vmul.f32 %v1811, 0.01
        %v2096 = vmul.f32 %v1813, 0.01
        %v2097 = vmul.f32 %v1622, 0.01
        %v2098 = vmul.f32 %v1624, 0.01
        %v2099 = vmul.f32 %v1815, 0.01
        %v2100 = vmul.f32 %v1817, 0.01
        %v2101 = vmul.f32 %v1628, 0.01
        %v2102 = vmul.f32 %v1630, 0.01
        %v2103 = vmul.f32 %v1821, 0.01
        %v2104 = vmul.f32 %v1823, 0.01
        %v2105 = vmul.f32 %v1632, 0.01
        %v2106 = vmul.f32 %v1634, 0.01
        %v2107 = vmul.f32 %v1825, 0.01
        %v2108 = vmul.f32 %v1827, 0.01
        %v2109 = vmul.f32 %v1638, 0.01
        %v2110 = vmul.f32 %v1640, 0.01
        %v2111 = vmul.f32 %v1831, 0.01
        %v2112 = vmul.f32 %v1833, 0.01
        %v2113 = vmul.f32 %v1642, 0.01
        %v2114 = vmul.f32 %v1644, 0.01
        %v2115 = vmul.f32 %v1835, 0.01
        %v2116 = vmul.f32 %v1837, 0.01
        %v2117 = vmul.f32 %v1648, 0.01
        %v2118 = vmul.f32 %v1650, 0.01
        %v2119 = vmul.f32 %v1841, 0.01
        %v2120 = vmul.f32 %v1843, 0.01
        %v2121 = vmul.f32 %v1652, 0.01
        %v2122 = vmul.f32 %v1654, 0.01
        %v2123 = vmul.f32 %v1845, 0.01
        %v2124 = vmul.f32 %v1847, 0.01
        %v2125 = vmul.f32 %v1658, 0.01
        %v2126 = vmul.f32 %v1660, 0.01
        %v2127 = vmul.f32 %v1851, 0.01
        %v2128 = vmul.f32 %v1853, 0.01
        %v2129 = vmul.f32 %v1662, 0.01
        %v2130 = vmul.f32 %v1664, 0.01
        %v2131 = vmul.f32 %v1855, 0.01
        %v2132 = vmul.f32 %v1857, 0.01
        %v2133 = vmul.f32 %v1668, 0.01
        %v2134 = vmul.f32 %v1670, 0.01
        %v2135 = vmul.f32 %v1861, 0.01
        %v2136 = vmul.f32 %v1863, 0.01
        %v2137 = vmul.f32 %v1672, 0.01
        %v2138 = vmul.f32 %v1674, 0.01
        %v2139 = vmul.f32 %v1865, 0.01
        %v2140 = vmul.f32 %v1867, 0.01
        %v2141 = vmul.f32 %v1678, 0.01
        %v2142 = vmul.f32 %v1680, 0.01
        %v2143 = vmul.f32 %v1871, 0.01
        %v2144 = vmul.f32 %v1873, 0.01
        %v2145 = vmul.f32 %v1682, 0.01
        %v2146 = vmul.f32 %v1684, 0.01
        %v2147 = vmul.f32 %v1875, 0.01
        %v2148 = vmul.f32 %v1877, 0.01
        %v2149 = vmul.f32 %v1688, 0.01
        %v2150 = vmul.f32 %v1690, 0.01
        %v2151 = vmul.f32 %v1881, 0.01
        %v2152 = vmul.f32 %v1883, 0.01
        %v2153 = vmul.f32 %v1692, 0.01
        %v2154 = vmul.f32 %v1694, 0.01
        %v2155 = vmul.f32 %v1885, 0.01
        %v2156 = vmul.f32 %v1887, 0.01
        %v2157 = vmul.f32 %v1698, 0.01
        %v2158 = vmul.f32 %v1700, 0.01
        %v2159 = vmul.f32 %v1891, 0.01
        %v2160 = vmul.f32 %v1893, 0.01
        %v2161 = vmul.f32 %v1702, 0.01
        %v2162 = vmul.f32 %v1704, 0.01
        %v2163 = vmul.f32 %v1895, 0.01
        %v2164 = vmul.f32 %v1897, 0.01
        %v2165 = vmul.f32 %v1708, 0.01
        %v2166 = vmul.f32 %v1710, 0.01
        %v2167 = vmul.f32 %v1901, 0.01
        %v2168 = vmul.f32 %v1903, 0.01
        %v2169 = vmul.f32 %v1712, 0.01
        %v2170 = vmul.f32 %v1714, 0.01
        %v2171 = vmul.f32 %v1905, 0.01
        %v2172 = vmul.f32 %v1907, 0.01
        %v2173 = vmul.f32 %v1718, 0.01
        %v2174 = vmul.f32 %v1720, 0.01
        %v2175 = vmul.f32 %v1911, 0.01
        %v2176 = vmul.f32 %v1913, 0.01
        %v2177 = vmul.f32 %v1722, 0.01
        %v2178 = vmul.f32 %v1724, 0.01
        %v2179 = vmul.f32 %v1915, 0.01
        %v2180 = vmul.f32 %v1917, 0.01
        %v2181 = vmul.f32 %v1728, 0.01
        %v2182 = vmul.f32 %v1730, 0.01
        %v2183 = vmul.f32 %v1921, 0.01
        %v2184 = vmul.f32 %v1923, 0.01
        %v2185 = vmul.f32 %v1732, 0.01
        %v2186 = vmul.f32 %v1734, 0.01
        %v2187 = vmul.f32 %v1925, 0.01
        %v2188 = vmul.f32 %v1927, 0.01
        %v2189 = vmul.f32 %v1738, 0.01
        %v2190 = vmul.f32 %v1740, 0.01
        %v2191 = vmul.f32 %v1931, 0.01
        %v2192 = vmul.f32 %v1933, 0.01
        %v2193 = vmul.f32 %v1742, 0.01
        %v2194 = vmul.f32 %v1744, 0.01
        %v2195 = vmul.f32 %v1935, 0.01
        %v2196 = vmul.f32 %v1937, 0.01
        %v2197 = vmul.f32 %v1748, 0.01
        %v2198 = vmul.f32 %v1750, 0.01
        %v2199 = vmul.f32 %v1941, 0.01
        %v2200 = vmul.f32 %v1943, 0.01
        %v2201 = vmul.f32 %v1752, 0.01
        %v2202 = vmul.f32 %v1754, 0.01
        %v2203 = vmul.f32 %v1945, 0.01
        %v2204 = vmul.f32 %v1947, 0.01
        %v2205 = vsel %vm1949, %v1598, %v2077
        %v2206 = vsel %vm1950, %v1600, %v2078
        %v2207 = vsel %vm1951, %v1791, %v2079
        %v2208 = vsel %vm1952, %v1793, %v2080
        %v2209 = vsel %vm1953, %v1602, %v2081
        %v2210 = vsel %vm1954, %v1604, %v2082
        %v2211 = vsel %vm1955, %v1795, %v2083
        %v2212 = vsel %vm1956, %v1797, %v2084
        %v2213 = vsel %vm1957, %v1608, %v2085
        %v2214 = vsel %vm1958, %v1610, %v2086
        %v2215 = vsel %vm1959, %v1801, %v2087
        %v2216 = vsel %vm1960, %v1803, %v2088
        %v2217 = vsel %vm1961, %v1612, %v2089
        %v2218 = vsel %vm1962, %v1614, %v2090
        %v2219 = vsel %vm1963, %v1805, %v2091
        %v2220 = vsel %vm1964, %v1807, %v2092
        %v2221 = vsel %vm1965, %v1618, %v2093
        %v2222 = vsel %vm1966, %v1620, %v2094
        %v2223 = vsel %vm1967, %v1811, %v2095
        %v2224 = vsel %vm1968, %v1813, %v2096
        %v2225 = vsel %vm1969, %v1622, %v2097
        %v2226 = vsel %vm1970, %v1624, %v2098
        %v2227 = vsel %vm1971, %v1815, %v2099
        %v2228 = vsel %vm1972, %v1817, %v2100
        %v2229 = vsel %vm1973, %v1628, %v2101
        %v2230 = vsel %vm1974, %v1630, %v2102
        %v2231 = vsel %vm1975, %v1821, %v2103
        %v2232 = vsel %vm1976, %v1823, %v2104
        %v2233 = vsel %vm1977, %v1632, %v2105
        %v2234 = vsel %vm1978, %v1634, %v2106
        %v2235 = vsel %vm1979, %v1825, %v2107
        %v2236 = vsel %vm1980, %v1827, %v2108
        %v2237 = vsel %vm1981, %v1638, %v2109
        %v2238 = vsel %vm1982, %v1640, %v2110
        %v2239 = vsel %vm1983, %v1831, %v2111
        %v2240 = vsel %vm1984, %v1833, %v2112
        %v2241 = vsel %vm1985, %v1642, %v2113
        %v2242 = vsel %vm1986, %v1644, %v2114
        %v2243 = vsel %vm1987, %v1835, %v2115
        %v2244 = vsel %vm1988, %v1837, %v2116
        %v2245 = vsel %vm1989, %v1648, %v2117
        %v2246 = vsel %vm1990, %v1650, %v2118
        %v2247 = vsel %vm1991, %v1841, %v2119
        %v2248 = vsel %vm1992, %v1843, %v2120
        %v2249 = vsel %vm1993, %v1652, %v2121
        %v2250 = vsel %vm1994, %v1654, %v2122
        %v2251 = vsel %vm1995, %v1845, %v2123
        %v2252 = vsel %vm1996, %v1847, %v2124
        %v2253 = vsel %vm1997, %v1658, %v2125
        %v2254 = vsel %vm1998, %v1660, %v2126
        %v2255 = vsel %vm1999, %v1851, %v2127
        %v2256 = vsel %vm2000, %v1853, %v2128
        %v2257 = vsel %vm2001, %v1662, %v2129
        %v2258 = vsel %vm2002, %v1664, %v2130
        %v2259 = vsel %vm2003, %v1855, %v2131
        %v2260 = vsel %vm2004, %v1857, %v2132
        %v2261 = vsel %vm2005, %v1668, %v2133
        %v2262 = vsel %vm2006, %v1670, %v2134
        %v2263 = vsel %vm2007, %v1861, %v2135
        %v2264 = vsel %vm2008, %v1863, %v2136
        %v2265 = vsel %vm2009, %v1672, %v2137
        %v2266 = vsel %vm2010, %v1674, %v2138
        %v2267 = vsel %vm2011, %v1865, %v2139
        %v2268 = vsel %vm2012, %v1867, %v2140
        %v2269 = vsel %vm2013, %v1678, %v2141
        %v2270 = vsel %vm2014, %v1680, %v2142
        %v2271 = vsel %vm2015, %v1871, %v2143
        %v2272 = vsel %vm2016, %v1873, %v2144
        %v2273 = vsel %vm2017, %v1682, %v2145
        %v2274 = vsel %vm2018, %v1684, %v2146
        %v2275 = vsel %vm2019, %v1875, %v2147
        %v2276 = vsel %vm2020, %v1877, %v2148
        %v2277 = vsel %vm2021, %v1688, %v2149
        %v2278 = vsel %vm2022, %v1690, %v2150
        %v2279 = vsel %vm2023, %v1881, %v2151
        %v2280 = vsel %vm2024, %v1883, %v2152
        %v2281 = vsel %vm2025, %v1692, %v2153
        %v2282 = vsel %vm2026, %v1694, %v2154
        %v2283 = vsel %vm2027, %v1885, %v2155
        %v2284 = vsel %vm2028, %v1887, %v2156
        %v2285 = vsel %vm2029, %v1698, %v2157
        %v2286 = vsel %vm2030, %v1700, %v2158
        %v2287 = vsel %vm2031, %v1891, %v2159
        %v2288 = vsel %vm2032, %v1893, %v2160
        %v2289 = vsel %vm2033, %v1702, %v2161
        %v2290 = vsel %vm2034, %v1704, %v2162
        %v2291 = vsel %vm2035, %v1895, %v2163
        %v2292 = vsel %vm2036, %v1897, %v2164
        %v2293 = vsel %vm2037, %v1708, %v2165
        %v2294 = vsel %vm2038, %v1710, %v2166
        %v2295 = vsel %vm2039, %v1901, %v2167
        %v2296 = vsel %vm2040, %v1903, %v2168
        %v2297 = vsel %vm2041, %v1712, %v2169
        %v2298 = vsel %vm2042, %v1714, %v2170
        %v2299 = vsel %vm2043, %v1905, %v2171
        %v2300 = vsel %vm2044, %v1907, %v2172
        %v2301 = vsel %vm2045, %v1718, %v2173
        %v2302 = vsel %vm2046, %v1720, %v2174
        %v2303 = vsel %vm2047, %v1911, %v2175
        %v2304 = vsel %vm2048, %v1913, %v2176
        %v2305 = vsel %vm2049, %v1722, %v2177
        %v2306 = vsel %vm2050, %v1724, %v2178
        %v2307 = vsel %vm2051, %v1915, %v2179
        %v2308 = vsel %vm2052, %v1917, %v2180
        %v2309 = vsel %vm2053, %v1728, %v2181
        %v2310 = vsel %vm2054, %v1730, %v2182
        %v2311 = vsel %vm2055, %v1921, %v2183
        %v2312 = vsel %vm2056, %v1923, %v2184
        %v2313 = vsel %vm2057, %v1732, %v2185
        %v2314 = vsel %vm2058, %v1734, %v2186
        %v2315 = vsel %vm2059, %v1925, %v2187
        %v2316 = vsel %vm2060, %v1927, %v2188
        %v2317 = vsel %vm2061, %v1738, %v2189
        %v2318 = vsel %vm2062, %v1740, %v2190
        %v2319 = vsel %vm2063, %v1931, %v2191
        %v2320 = vsel %vm2064, %v1933, %v2192
        %v2321 = vsel %vm2065, %v1742, %v2193
        %v2322 = vsel %vm2066, %v1744, %v2194
        %v2323 = vsel %vm2067, %v1935, %v2195
        %v2324 = vsel %vm2068, %v1937, %v2196
        %v2325 = vsel %vm2069, %v1748, %v2197
        %v2326 = vsel %vm2070, %v1750, %v2198
        %v2327 = vsel %vm2071, %v1941, %v2199
        %v2328 = vsel %vm2072, %v1943, %v2200
        %v2329 = vsel %vm2073, %v1752, %v2201
        %v2330 = vsel %vm2074, %v1754, %v2202
        %v2331 = vsel %vm2075, %v1945, %v2203
        %v2332 = vsel %vm2076, %v1947, %v2204
        %2333 = vset.pattern.permute.xlu0 3
        %2334 = vperm.xlu0 %2333, %v198
        %v2335 = vpop.permute.xlu0 %2334
        %2337 = vset.pattern.permute.xlu0 3
        %2338 = vperm.xlu0 %2337, %v199
        %v2339 = vpop.permute.xlu0 %2338
        %2341 = vset.pattern.permute.xlu0 3
        %2342 = vperm.xlu0 %2341, %v200
        %v2343 = vpop.permute.xlu0 %2342
        %2345 = vset.pattern.permute.xlu0 3
        %2346 = vperm.xlu0 %2345, %v201
        %v2347 = vpop.permute.xlu0 %2346
        %2349 = vset.pattern.permute.xlu0 3
        %2350 = vperm.xlu0 %2349, %v202
        %v2351 = vpop.permute.xlu0 %2350
        %2353 = vset.pattern.permute.xlu0 3
        %2354 = vperm.xlu0 %2353, %v203
        %v2355 = vpop.permute.xlu0 %2354
        %2357 = vset.pattern.permute.xlu0 3
        %2358 = vperm.xlu0 %2357, %v204
        %v2359 = vpop.permute.xlu0 %2358
        %2361 = vset.pattern.permute.xlu0 3
        %2362 = vperm.xlu0 %2361, %v205
        %v2363 = vpop.permute.xlu0 %2362
        %2365 = vset.pattern.permute.xlu0 3
        %2366 = vperm.xlu0 %2365, %v206
        %v2367 = vpop.permute.xlu0 %2366
        %2369 = vset.pattern.permute.xlu0 3
        %2370 = vperm.xlu0 %2369, %v207
        %v2371 = vpop.permute.xlu0 %2370
        %2373 = vset.pattern.permute.xlu0 3
        %2374 = vperm.xlu0 %2373, %v208
        %v2375 = vpop.permute.xlu0 %2374
        %2377 = vset.pattern.permute.xlu0 3
        %2378 = vperm.xlu0 %2377, %v209
        %v2379 = vpop.permute.xlu0 %2378
        %2381 = vset.pattern.permute.xlu0 3
        %2382 = vperm.xlu0 %2381, %v210
        %v2383 = vpop.permute.xlu0 %2382
        %2385 = vset.pattern.permute.xlu0 3
        %2386 = vperm.xlu0 %2385, %v211
        %v2387 = vpop.permute.xlu0 %2386
        %2389 = vset.pattern.permute.xlu0 3
        %2390 = vperm.xlu0 %2389, %v212
        %v2391 = vpop.permute.xlu0 %2390
        %2393 = vset.pattern.permute.xlu0 3
        %2394 = vperm.xlu0 %2393, %v213
        %v2395 = vpop.permute.xlu0 %2394
        %2397 = vset.pattern.permute.xlu0 3
        %2398 = vperm.xlu0 %2397, %v214
        %v2399 = vpop.permute.xlu0 %2398
        %2401 = vset.pattern.permute.xlu0 3
        %2402 = vperm.xlu0 %2401, %v215
        %v2403 = vpop.permute.xlu0 %2402
        %2405 = vset.pattern.permute.xlu0 3
        %2406 = vperm.xlu0 %2405, %v216
        %v2407 = vpop.permute.xlu0 %2406
        %2409 = vset.pattern.permute.xlu0 3
        %2410 = vperm.xlu0 %2409, %v217
        %v2411 = vpop.permute.xlu0 %2410
        %2413 = vset.pattern.permute.xlu0 3
        %2414 = vperm.xlu0 %2413, %v218
        %v2415 = vpop.permute.xlu0 %2414
        %2417 = vset.pattern.permute.xlu0 3
        %2418 = vperm.xlu0 %2417, %v219
        %v2419 = vpop.permute.xlu0 %2418
        %2421 = vset.pattern.permute.xlu0 3
        %2422 = vperm.xlu0 %2421, %v220
        %v2423 = vpop.permute.xlu0 %2422
        %2425 = vset.pattern.permute.xlu0 3
        %2426 = vperm.xlu0 %2425, %v221
        %v2427 = vpop.permute.xlu0 %2426
        %2429 = vset.pattern.permute.xlu0 3
        %2430 = vperm.xlu0 %2429, %v222
        %v2431 = vpop.permute.xlu0 %2430
        %2433 = vset.pattern.permute.xlu0 3
        %2434 = vperm.xlu0 %2433, %v223
        %v2435 = vpop.permute.xlu0 %2434
        %2437 = vset.pattern.permute.xlu0 3
        %2438 = vperm.xlu0 %2437, %v224
        %v2439 = vpop.permute.xlu0 %2438
        %2441 = vset.pattern.permute.xlu0 3
        %2442 = vperm.xlu0 %2441, %v225
        %v2443 = vpop.permute.xlu0 %2442
        %2445 = vset.pattern.permute.xlu0 3
        %2446 = vperm.xlu0 %2445, %v226
        %v2447 = vpop.permute.xlu0 %2446
        %2449 = vset.pattern.permute.xlu0 3
        %2450 = vperm.xlu0 %2449, %v227
        %v2451 = vpop.permute.xlu0 %2450
        %2453 = vset.pattern.permute.xlu0 3
        %2454 = vperm.xlu0 %2453, %v228
        %v2455 = vpop.permute.xlu0 %2454
        %2457 = vset.pattern.permute.xlu0 3
        %2458 = vperm.xlu0 %2457, %v229
        %v2459 = vpop.permute.xlu0 %2458
        %v2461 = vmul.f32 %v2205, %v2335
        %v2462 = vmul.f32 %v2206, %v2335
        %v2463 = vmul.f32 %v2207, %v2335
        %v2464 = vmul.f32 %v2208, %v2335
        %v2465 = vmul.f32 %v2209, %v2339
        %v2466 = vmul.f32 %v2210, %v2339
        %v2467 = vmul.f32 %v2211, %v2339
        %v2468 = vmul.f32 %v2212, %v2339
        %v2469 = vmul.f32 %v2213, %v2343
        %v2470 = vmul.f32 %v2214, %v2343
        %v2471 = vmul.f32 %v2215, %v2343
        %v2472 = vmul.f32 %v2216, %v2343
        %v2473 = vmul.f32 %v2217, %v2347
        %v2474 = vmul.f32 %v2218, %v2347
        %v2475 = vmul.f32 %v2219, %v2347
        %v2476 = vmul.f32 %v2220, %v2347
        %v2477 = vmul.f32 %v2221, %v2351
        %v2478 = vmul.f32 %v2222, %v2351
        %v2479 = vmul.f32 %v2223, %v2351
        %v2480 = vmul.f32 %v2224, %v2351
        %v2481 = vmul.f32 %v2225, %v2355
        %v2482 = vmul.f32 %v2226, %v2355
        %v2483 = vmul.f32 %v2227, %v2355
        %v2484 = vmul.f32 %v2228, %v2355
        %v2485 = vmul.f32 %v2229, %v2359
        %v2486 = vmul.f32 %v2230, %v2359
        %v2487 = vmul.f32 %v2231, %v2359
        %v2488 = vmul.f32 %v2232, %v2359
        %v2489 = vmul.f32 %v2233, %v2363
        %v2490 = vmul.f32 %v2234, %v2363
        %v2491 = vmul.f32 %v2235, %v2363
        %v2492 = vmul.f32 %v2236, %v2363
        %v2493 = vmul.f32 %v2237, %v2367
        %v2494 = vmul.f32 %v2238, %v2367
        %v2495 = vmul.f32 %v2239, %v2367
        %v2496 = vmul.f32 %v2240, %v2367
        %v2497 = vmul.f32 %v2241, %v2371
        %v2498 = vmul.f32 %v2242, %v2371
        %v2499 = vmul.f32 %v2243, %v2371
        %v2500 = vmul.f32 %v2244, %v2371
        %v2501 = vmul.f32 %v2245, %v2375
        %v2502 = vmul.f32 %v2246, %v2375
        %v2503 = vmul.f32 %v2247, %v2375
        %v2504 = vmul.f32 %v2248, %v2375
        %v2505 = vmul.f32 %v2249, %v2379
        %v2506 = vmul.f32 %v2250, %v2379
        %v2507 = vmul.f32 %v2251, %v2379
        %v2508 = vmul.f32 %v2252, %v2379
        %v2509 = vmul.f32 %v2253, %v2383
        %v2510 = vmul.f32 %v2254, %v2383
        %v2511 = vmul.f32 %v2255, %v2383
        %v2512 = vmul.f32 %v2256, %v2383
        %v2513 = vmul.f32 %v2257, %v2387
        %v2514 = vmul.f32 %v2258, %v2387
        %v2515 = vmul.f32 %v2259, %v2387
        %v2516 = vmul.f32 %v2260, %v2387
        %v2517 = vmul.f32 %v2261, %v2391
        %v2518 = vmul.f32 %v2262, %v2391
        %v2519 = vmul.f32 %v2263, %v2391
        %v2520 = vmul.f32 %v2264, %v2391
        %v2521 = vmul.f32 %v2265, %v2395
        %v2522 = vmul.f32 %v2266, %v2395
        %v2523 = vmul.f32 %v2267, %v2395
        %v2524 = vmul.f32 %v2268, %v2395
        %v2525 = vmul.f32 %v2269, %v2399
        %v2526 = vmul.f32 %v2270, %v2399
        %v2527 = vmul.f32 %v2271, %v2399
        %v2528 = vmul.f32 %v2272, %v2399
        %v2529 = vmul.f32 %v2273, %v2403
        %v2530 = vmul.f32 %v2274, %v2403
        %v2531 = vmul.f32 %v2275, %v2403
        %v2532 = vmul.f32 %v2276, %v2403
        %v2533 = vmul.f32 %v2277, %v2407
        %v2534 = vmul.f32 %v2278, %v2407
        %v2535 = vmul.f32 %v2279, %v2407
        %v2536 = vmul.f32 %v2280, %v2407
        %v2537 = vmul.f32 %v2281, %v2411
        %v2538 = vmul.f32 %v2282, %v2411
        %v2539 = vmul.f32 %v2283, %v2411
        %v2540 = vmul.f32 %v2284, %v2411
        %v2541 = vmul.f32 %v2285, %v2415
        %v2542 = vmul.f32 %v2286, %v2415
        %v2543 = vmul.f32 %v2287, %v2415
        %v2544 = vmul.f32 %v2288, %v2415
        %v2545 = vmul.f32 %v2289, %v2419
        %v2546 = vmul.f32 %v2290, %v2419
        %v2547 = vmul.f32 %v2291, %v2419
        %v2548 = vmul.f32 %v2292, %v2419
        %v2549 = vmul.f32 %v2293, %v2423
        %v2550 = vmul.f32 %v2294, %v2423
        %v2551 = vmul.f32 %v2295, %v2423
        %v2552 = vmul.f32 %v2296, %v2423
        %v2553 = vmul.f32 %v2297, %v2427
        %v2554 = vmul.f32 %v2298, %v2427
        %v2555 = vmul.f32 %v2299, %v2427
        %v2556 = vmul.f32 %v2300, %v2427
        %v2557 = vmul.f32 %v2301, %v2431
        %v2558 = vmul.f32 %v2302, %v2431
        %v2559 = vmul.f32 %v2303, %v2431
        %v2560 = vmul.f32 %v2304, %v2431
        %v2561 = vmul.f32 %v2305, %v2435
        %v2562 = vmul.f32 %v2306, %v2435
        %v2563 = vmul.f32 %v2307, %v2435
        %v2564 = vmul.f32 %v2308, %v2435
        %v2565 = vmul.f32 %v2309, %v2439
        %v2566 = vmul.f32 %v2310, %v2439
        %v2567 = vmul.f32 %v2311, %v2439
        %v2568 = vmul.f32 %v2312, %v2439
        %v2569 = vmul.f32 %v2313, %v2443
        %v2570 = vmul.f32 %v2314, %v2443
        %v2571 = vmul.f32 %v2315, %v2443
        %v2572 = vmul.f32 %v2316, %v2443
        %v2573 = vmul.f32 %v2317, %v2447
        %v2574 = vmul.f32 %v2318, %v2447
        %v2575 = vmul.f32 %v2319, %v2447
        %v2576 = vmul.f32 %v2320, %v2447
        %v2577 = vmul.f32 %v2321, %v2451
        %v2578 = vmul.f32 %v2322, %v2451
        %v2579 = vmul.f32 %v2323, %v2451
        %v2580 = vmul.f32 %v2324, %v2451
        %v2581 = vmul.f32 %v2325, %v2455
        %v2582 = vmul.f32 %v2326, %v2455
        %v2583 = vmul.f32 %v2327, %v2455
        %v2584 = vmul.f32 %v2328, %v2455
        %v2585 = vmul.f32 %v2329, %v2459
        %v2586 = vmul.f32 %v2330, %v2459
        %v2587 = vmul.f32 %v2331, %v2459
        %v2588 = vmul.f32 %v2332, %v2459
        %v2589 = vadd.f32 %v2461, %v2465
        %v2590 = vadd.f32 %v2589, %v2469
        %v2591 = vadd.f32 %v2590, %v2473
        %v2592 = vadd.f32 %v2591, %v2477
        %v2593 = vadd.f32 %v2592, %v2481
        %v2594 = vadd.f32 %v2593, %v2485
        %v2595 = vadd.f32 %v2594, %v2489
        %v2596 = vadd.f32 %v2595, %v2493
        %v2597 = vadd.f32 %v2596, %v2497
        %v2598 = vadd.f32 %v2597, %v2501
        %v2599 = vadd.f32 %v2598, %v2505
        %v2600 = vadd.f32 %v2599, %v2509
        %v2601 = vadd.f32 %v2600, %v2513
        %v2602 = vadd.f32 %v2601, %v2517
        %v2603 = vadd.f32 %v2602, %v2521
        %v2604 = vadd.f32 %v2603, %v2525
        %v2605 = vadd.f32 %v2604, %v2529
        %v2606 = vadd.f32 %v2605, %v2533
        %v2607 = vadd.f32 %v2606, %v2537
        %v2608 = vadd.f32 %v2607, %v2541
        %v2609 = vadd.f32 %v2608, %v2545
        %v2610 = vadd.f32 %v2609, %v2549
        %v2611 = vadd.f32 %v2610, %v2553
        %v2612 = vadd.f32 %v2611, %v2557
        %v2613 = vadd.f32 %v2612, %v2561
        %v2614 = vadd.f32 %v2613, %v2565
        %v2615 = vadd.f32 %v2614, %v2569
        %v2616 = vadd.f32 %v2615, %v2573
        %v2617 = vadd.f32 %v2616, %v2577
        %v2618 = vadd.f32 %v2617, %v2581
        %v2619 = vadd.f32 %v2618, %v2585
        %v2620 = vrot.slane %v2619, 4
        %v2621 = vadd.f32 %v2619, %v2620
        %v2622 = vrot.slane %v2621, 2
        %v2623 = vadd.f32 %v2621, %v2622
        %v2624 = vrot.slane %v2623, 1
        %v2625 = vadd.f32 %v2623, %v2624
        %v2626 = vadd.f32 %v2462, %v2466
        %v2627 = vadd.f32 %v2626, %v2470
        %v2628 = vadd.f32 %v2627, %v2474
        %v2629 = vadd.f32 %v2628, %v2478
        %v2630 = vadd.f32 %v2629, %v2482
        %v2631 = vadd.f32 %v2630, %v2486
        %v2632 = vadd.f32 %v2631, %v2490
        %v2633 = vadd.f32 %v2632, %v2494
        %v2634 = vadd.f32 %v2633, %v2498
        %v2635 = vadd.f32 %v2634, %v2502
        %v2636 = vadd.f32 %v2635, %v2506
        %v2637 = vadd.f32 %v2636, %v2510
        %v2638 = vadd.f32 %v2637, %v2514
        %v2639 = vadd.f32 %v2638, %v2518
        %v2640 = vadd.f32 %v2639, %v2522
        %v2641 = vadd.f32 %v2640, %v2526
        %v2642 = vadd.f32 %v2641, %v2530
        %v2643 = vadd.f32 %v2642, %v2534
        %v2644 = vadd.f32 %v2643, %v2538
        %v2645 = vadd.f32 %v2644, %v2542
        %v2646 = vadd.f32 %v2645, %v2546
        %v2647 = vadd.f32 %v2646, %v2550
        %v2648 = vadd.f32 %v2647, %v2554
        %v2649 = vadd.f32 %v2648, %v2558
        %v2650 = vadd.f32 %v2649, %v2562
        %v2651 = vadd.f32 %v2650, %v2566
        %v2652 = vadd.f32 %v2651, %v2570
        %v2653 = vadd.f32 %v2652, %v2574
        %v2654 = vadd.f32 %v2653, %v2578
        %v2655 = vadd.f32 %v2654, %v2582
        %v2656 = vadd.f32 %v2655, %v2586
        %v2657 = vrot.slane %v2656, 4
        %v2658 = vadd.f32 %v2656, %v2657
        %v2659 = vrot.slane %v2658, 2
        %v2660 = vadd.f32 %v2658, %v2659
        %v2661 = vrot.slane %v2660, 1
        %v2662 = vadd.f32 %v2660, %v2661
        %v2663 = vadd.f32 %v2463, %v2467
        %v2664 = vadd.f32 %v2663, %v2471
        %v2665 = vadd.f32 %v2664, %v2475
        %v2666 = vadd.f32 %v2665, %v2479
        %v2667 = vadd.f32 %v2666, %v2483
        %v2668 = vadd.f32 %v2667, %v2487
        %v2669 = vadd.f32 %v2668, %v2491
        %v2670 = vadd.f32 %v2669, %v2495
        %v2671 = vadd.f32 %v2670, %v2499
        %v2672 = vadd.f32 %v2671, %v2503
        %v2673 = vadd.f32 %v2672, %v2507
        %v2674 = vadd.f32 %v2673, %v2511
        %v2675 = vadd.f32 %v2674, %v2515
        %v2676 = vadd.f32 %v2675, %v2519
        %v2677 = vadd.f32 %v2676, %v2523
        %v2678 = vadd.f32 %v2677, %v2527
        %v2679 = vadd.f32 %v2678, %v2531
        %v2680 = vadd.f32 %v2679, %v2535
        %v2681 = vadd.f32 %v2680, %v2539
        %v2682 = vadd.f32 %v2681, %v2543
        %v2683 = vadd.f32 %v2682, %v2547
        %v2684 = vadd.f32 %v2683, %v2551
        %v2685 = vadd.f32 %v2684, %v2555
        %v2686 = vadd.f32 %v2685, %v2559
        %v2687 = vadd.f32 %v2686, %v2563
        %v2688 = vadd.f32 %v2687, %v2567
        %v2689 = vadd.f32 %v2688, %v2571
        %v2690 = vadd.f32 %v2689, %v2575
        %v2691 = vadd.f32 %v2690, %v2579
        %v2692 = vadd.f32 %v2691, %v2583
        %v2693 = vadd.f32 %v2692, %v2587
        %v2694 = vrot.slane %v2693, 4
        %v2695 = vadd.f32 %v2693, %v2694
        %v2696 = vrot.slane %v2695, 2
        %v2697 = vadd.f32 %v2695, %v2696
        %v2698 = vrot.slane %v2697, 1
        %v2699 = vadd.f32 %v2697, %v2698
        %v2700 = vadd.f32 %v2464, %v2468
        %v2701 = vadd.f32 %v2700, %v2472
        %v2702 = vadd.f32 %v2701, %v2476
        %v2703 = vadd.f32 %v2702, %v2480
        %v2704 = vadd.f32 %v2703, %v2484
        %v2705 = vadd.f32 %v2704, %v2488
        %v2706 = vadd.f32 %v2705, %v2492
        %v2707 = vadd.f32 %v2706, %v2496
        %v2708 = vadd.f32 %v2707, %v2500
        %v2709 = vadd.f32 %v2708, %v2504
        %v2710 = vadd.f32 %v2709, %v2508
        %v2711 = vadd.f32 %v2710, %v2512
        %v2712 = vadd.f32 %v2711, %v2516
        %v2713 = vadd.f32 %v2712, %v2520
        %v2714 = vadd.f32 %v2713, %v2524
        %v2715 = vadd.f32 %v2714, %v2528
        %v2716 = vadd.f32 %v2715, %v2532
        %v2717 = vadd.f32 %v2716, %v2536
        %v2718 = vadd.f32 %v2717, %v2540
        %v2719 = vadd.f32 %v2718, %v2544
        %v2720 = vadd.f32 %v2719, %v2548
        %v2721 = vadd.f32 %v2720, %v2552
        %v2722 = vadd.f32 %v2721, %v2556
        %v2723 = vadd.f32 %v2722, %v2560
        %v2724 = vadd.f32 %v2723, %v2564
        %v2725 = vadd.f32 %v2724, %v2568
        %v2726 = vadd.f32 %v2725, %v2572
        %v2727 = vadd.f32 %v2726, %v2576
        %v2728 = vadd.f32 %v2727, %v2580
        %v2729 = vadd.f32 %v2728, %v2584
        %v2730 = vadd.f32 %v2729, %v2588
        %v2731 = vrot.slane %v2730, 4
        %v2732 = vadd.f32 %v2730, %v2731
        %v2733 = vrot.slane %v2732, 2
        %v2734 = vadd.f32 %v2732, %v2733
        %v2735 = vrot.slane %v2734, 1
        %v2736 = vadd.f32 %v2734, %v2735
        %s2737 = sld [smem:[#allocation2]]
        %v2738 = vstv %s2737
        %v2739 = vadd.f32 %v2625, %v2738
        %v2740 = vadd.f32 %v2662, %v2738
        %v2741 = vadd.f32 %v2699, %v2738
        %v2742 = vadd.f32 %v2736, %v2738
        %v2747 = vcombine.low %v2739, %v2740
        %v2748 = vcombine.low %v2741, %v2742
        %v2750 = vunpack.c.l.s4 1966171168
        %v2751 = vunpack.c.0.s8 %v2750
        %v2752 = vlaneseq
        %v2753 = vshrl.u32 %v2752, 7
        %v2754 = vsub.s32 %v2751, %v2753
        %v2755 = vrot.slane %v2747, %v2754
        %v2757 = vunpack.c.l.s4 1966171168
        %v2758 = vunpack.c.0.s8 %v2757
        %v2759 = vlaneseq
        %v2760 = vshrl.u32 %v2759, 7
        %v2761 = vsub.s32 %v2758, %v2760
        %v2762 = vrot.slane %v2748, %v2761
        %v2763 = vcombine.low %v2755, %v2762
        %v2765 = vunpack.c.l.s4 1966171168
        %v2766 = vunpack.c.0.s8 %v2765
        %v2767 = vlaneseq
        %v2768 = vshrl.u32 %v2767, 7
        %v2769 = vsub.s32 %v2766, %v2768
        %v2770 = vrot.slane %v2763, %v2769
        %v2772 = vlaneseq
        %vm2773 = vcmp.ge.s32.totalorder %v2772, 0
        %vm2774 = vcmp.lt.s32.totalorder %v2772, 512
        %vm2775 = vmand %vm2773, %vm2774
        %2776 = vst.msk [vmem:[%s190] sm:$0xf] %vm2775, %v2770
        %s2777 = sand.u32 %s116, 1
        %s2778 = scalar_lea.sflag [#allocation4], %s2777
        %s2779 = sand.u32 %s116, 1
        %s2780 = smul.addr %s2779, 4
        %s2781 = scalar_lea.vmem [#allocation3], %s2780
        // Predicated region
        $region37: #{tpu_custom_call.1} parent=35 // pred_check
          %p2782 = pneg %p126
        $region38: #{tpu_custom_call.1} parent=35 // pred_check_branch
          %2784 = sbr.rel (%p2782) target = $region40
        $region39: #{tpu_custom_call.1} parent=35 // pred_region
          %s2785 = smul.u32 4, %s19
          %s2787 = ssub.s32 64, 64
          %2788 = vsyncadd %s2778, %s2787
          %s2789 = smul.addr %s2785, 16
          %s2790 = scalar_lea.hbm %s4, %s2789
          %s2792 = sshll.u32 %s2781, 4
          %s2793 = int_to_ptr.vmem [resolvable:$true] %s2792
          %2795 = dma.vmem_to_hbm [thread:$0]  %s2793, 64, %s2790, %s2778
        $region40: #{tpu_custom_call.1} parent=35 // pred_fallthru
          _
      $region36: #{tpu_custom_call.1} parent=5 // pred_fallthru
        _
      %p2796 = scmp.le.s32.totalorder 2, %s14
      // Predicated region
      $region41: #{tpu_custom_call.1} parent=5 // pred_check
        %p2797 = pneg %p2796
      $region42: #{tpu_custom_call.1} parent=5 // pred_check_branch
        %2799 = sbr.rel (%p2797) target = $region44
      $region43: #{tpu_custom_call.1} parent=5 // pred_region
        %s2800 = ssub.s32 %s14, 2
        // Predicated region
        $region45: #{tpu_custom_call.1} parent=43 // pred_check
          %p2801 = pneg %p132
        $region46: #{tpu_custom_call.1} parent=43 // pred_check_branch
          %2803 = sbr.rel (%p2801) target = $region48
        $region47: #{tpu_custom_call.1} parent=43 // pred_region
          %s2804 = sand.u32 %s117, 1
          %s2805 = scalar_lea.sflag [#allocation4], %s2804
          %s2806 = sand.u32 %s117, 1
          %s2807 = smul.addr %s2806, 4
          %s2808 = scalar_lea.vmem [#allocation3], %s2807
          %2809 = dma.done %s2805, 64
        $region48: #{tpu_custom_call.1} parent=43 // pred_fallthru
          _
      $region44: #{tpu_custom_call.1} parent=5 // pred_fallthru
        _
    $region6: #{tpu_custom_call.1} parent=1 // loop_footer
      %s18 = sadd.s32 1, %s14
    $region7: #{tpu_custom_call.1} parent=1 // loop_footer_branch
      %13 = sbr.rel target = $region3
    $region8: #{tpu_custom_call.1} parent=1 // loop_exit
      _
    %2810 = vsyncpa [#allocation4], 1
    %s2811 = scalar_lea.sflag [#allocation4], 1
    %2812 = vsyncpa %s2811, 1

</llo_original>
